<compile_context>
chip_gen: v5e
topology: v5e:2x2
jax: 0.10.0
libtpu: 0.0.40
codegen_flags: <defaults>
</compile_context>

<pallas_src>
import functools
import math

import jax
import jax.numpy as jnp
from jax.experimental import pallas as pl
from jax.experimental.pallas import tpu as pltpu

NUM_GROUPS = 8
EPS = 1e-5


def down_kernel(x_ref, w1_ref, w2_ref, prm_ref, g_ref, s_ref,
                oc_ref, od_ref, pad1_ref, pad2_ref, *, H, W, PAD):
    HW = H * W
    MARGIN = W + 1                      # farthest halo lane a 3x3/pool tap reads
    inv_n = 1.0 / float(HW)
    f32 = jnp.float32

    # Zero only the reachable halo margins (scratch persists across grid steps
    # and across cores, so "zero once at step 0" is not safe with a parallel
    # grid; zeroing 2*(W+1) lanes per row each step is essentially free).
    z1 = jnp.zeros((pad1_ref.shape[0], MARGIN), f32)
    pad1_ref[:, pl.ds(PAD - MARGIN, MARGIN)] = z1
    pad1_ref[:, pl.ds(PAD + HW, MARGIN)] = z1
    z2 = jnp.zeros((pad2_ref.shape[0], MARGIN), f32)
    pad2_ref[:, pl.ds(PAD - MARGIN, MARGIN)] = z2
    pad2_ref[:, pl.ds(PAD + HW, MARGIN)] = z2

    # In the flat (C, H*W) layout, left/right neighbours wrap across image
    # rows; vertical out-of-range reads land in the zeroed margins, so only
    # these two column masks are needed.
    col = jax.lax.broadcasted_iota(jnp.int32, (1, HW), 1) % W
    not_left = (col > 0).astype(f32)        # reading j-1 is invalid at j == 0
    not_right = (col < W - 1).astype(f32)   # reading j+1 is invalid at j == W-1

    def conv3x3(src, pad_ref, w_ref):
        # src: (C, HW) f32.  One fused im2col matmul:
        #   slab (9*C, HW) bf16  x  w (Cout, 9*C) bf16  ->  (Cout, HW) f32
        pad_ref[:, pl.ds(PAD, HW)] = src            # aligned interior store
        taps = []
        for dy in (-1, 0, 1):
            for dx in (-1, 0, 1):
                t = pad_ref[:, pl.ds(PAD + dy * W + dx, HW)]
                if dx == -1:
                    t = t * not_left
                elif dx == 1:
                    t = t * not_right
                taps.append(t)
        slab = jnp.concatenate(taps, axis=0).astype(jnp.bfloat16)
        return jnp.dot(w_ref[...], slab, preferred_element_type=jnp.float32)

    G = g_ref[...]          # (Cout, Cout) group-averaging matrix
    prm = prm_ref[...]      # (Cout, 6): b1, g1, be1, b2, g2, be2

    def gn_silu(h, gamma, beta):
        # GroupNorm(8) + SiLU, all in f32 on the (Cout, HW) activation.
        gmean = jnp.sum(jnp.dot(G, h, preferred_element_type=jnp.float32),
                        axis=1, keepdims=True) * inv_n
        d = h - gmean
        gvar = jnp.sum(jnp.dot(G, d * d, preferred_element_type=jnp.float32),
                       axis=1, keepdims=True) * inv_n
        y = d * jax.lax.rsqrt(gvar + EPS) * gamma + beta
        return y * jax.nn.sigmoid(y)

    # ---- conv1 -> GN -> SiLU ----
    a1 = conv3x3(x_ref[0], pad1_ref, w1_ref) + prm[:, 0:1]
    h1 = gn_silu(a1, prm[:, 1:2], prm[:, 2:3])

    # ---- conv2 -> GN -> SiLU ----
    a2 = conv3x3(h1, pad2_ref, w2_ref) + prm[:, 3:4]
    h2 = gn_silu(a2, prm[:, 4:5], prm[:, 5:6])

    # x_conv, stored lane-dense as (Cout, H*W) == NCHW after a free reshape.
    oc_ref[0] = h2.astype(oc_ref.dtype)

    # ---- MaxPool2d(2): shifted-window max + 0/1 selection matmul ----
    pad2_ref[:, pl.ds(PAD, HW)] = h2
    m = jnp.maximum(
        jnp.maximum(h2, pad2_ref[:, pl.ds(PAD + 1, HW)]),
        jnp.maximum(pad2_ref[:, pl.ds(PAD + W, HW)],
                    pad2_ref[:, pl.ds(PAD + W + 1, HW)]))
    od_ref[0] = jnp.dot(m, s_ref[...],
                        preferred_element_type=jnp.float32).astype(od_ref.dtype)


def down_forward(x_nchw, params):
    """x_nchw: (N, Cin, H, W) float32 -> (x_conv, x_down) in NCHW."""
    w1, b1, g1, be1, w2, b2, g2, be2 = params
    N, Cin, H, W = x_nchw.shape
    Cout = w1.shape[0]
    assert Cout % NUM_GROUPS == 0, "GroupNorm(8) requires out_ch % 8 == 0"
    assert H % 2 == 0 and W % 2 == 0, "MaxPool2d(2) requires even H, W"
    gs = Cout // NUM_GROUPS
    HW = H * W
    H2, W2 = H // 2, W // 2

    # Pad Cin up to a multiple of 8 so the f32 im2col pieces are sublane-tile
    # aligned; halo PAD rounded to 128 lanes so the interior scratch store is
    # vreg-aligned.
    Cin_p = ((Cin + 7) // 8) * 8
    PAD = ((W + 1 + 127) // 128) * 128
    HWE = HW + 2 * PAD

    # Keep NCHW; just flatten spatial into the lane dim (free reshape — no
    # transposes, no spatial jnp.pad in HBM).
    x_flat = x_nchw.astype(jnp.float32).reshape(N, Cin, HW)
    if Cin_p != Cin:
        x_flat = jnp.pad(x_flat, ((0, 0), (0, Cin_p - Cin), (0, 0)))

    # PyTorch OIHW -> (Cout, 9*C) tap-major / channel-minor, bf16 for the MXU.
    w1t = jnp.transpose(w1, (0, 2, 3, 1))                    # (Cout, 3, 3, Cin)
    if Cin_p != Cin:
        w1t = jnp.pad(w1t, ((0, 0), (0, 0), (0, 0), (0, Cin_p - Cin)))
    w1m = w1t.reshape(Cout, 9 * Cin_p).astype(jnp.bfloat16)
    w2m = jnp.transpose(w2, (0, 2, 3, 1)).reshape(Cout, 9 * Cout).astype(jnp.bfloat16)

    # All six per-channel vectors in a single block: b1, g1, be1, b2, g2, be2.
    prm = jnp.stack([b1, g1, be1, b2, g2, be2], axis=1).astype(jnp.float32)

    # Group-averaging matrix for GroupNorm statistics.
    gid = jnp.arange(Cout) // gs
    G = (gid[:, None] == gid[None, :]).astype(jnp.float32) / float(gs)

    # 0/1 selection matrix picking the 2x2-window anchor of every pooled pixel.
    q = jnp.arange(HW // 4)
    tgt = (2 * (q // W2)) * W + 2 * (q % W2)
    S = (jnp.arange(HW)[:, None] == tgt[None, :]).astype(jnp.float32)

    kernel = functools.partial(down_kernel, H=H, W=W, PAD=PAD)

    grid_spec = pltpu.PrefetchScalarGridSpec(
        num_scalar_prefetch=0,
        grid=(N,),
        in_specs=[
            pl.BlockSpec((1, Cin_p, HW), lambda b: (b, 0, 0)),
            pl.BlockSpec((Cout, 9 * Cin_p), lambda b: (0, 0)),
            pl.BlockSpec((Cout, 9 * Cout), lambda b: (0, 0)),
            pl.BlockSpec((Cout, 6), lambda b: (0, 0)),
            pl.BlockSpec((Cout, Cout), lambda b: (0, 0)),
            pl.BlockSpec((HW, HW // 4), lambda b: (0, 0)),
        ],
        out_specs=[
            pl.BlockSpec((1, Cout, HW), lambda b: (b, 0, 0)),
            pl.BlockSpec((1, Cout, HW // 4), lambda b: (b, 0, 0)),
        ],
        scratch_shapes=[
            pltpu.VMEM((Cin_p, HWE), jnp.float32),
            pltpu.VMEM((Cout, HWE), jnp.float32),
        ],
    )

    oc_flat, od_flat = pl.pallas_call(
        kernel,
        out_shape=(
            jax.ShapeDtypeStruct((N, Cout, HW), jnp.float32),
            jax.ShapeDtypeStruct((N, Cout, HW // 4), jnp.float32),
        ),
        grid_spec=grid_spec,
        compiler_params=pltpu.CompilerParams(
            dimension_semantics=("parallel",),     # batch is independent -> both v7x TCs
            vmem_limit_bytes=32 * 1024 * 1024,
        ),
    )(x_flat, w1m, w2m, prm, G, S)

    # Free reshapes back to the PyTorch NCHW convention (no transposes).
    x_conv = oc_flat.reshape(N, Cout, H, W)
    x_down = od_flat.reshape(N, Cout, H2, W2)
    return x_conv, x_down


# ---------------- pure-JAX reference (for sanity checking) ----------------
def _ref_forward(x, params):
    w1, b1, g1, be1, w2, b2, g2, be2 = params

    def conv(x, w, b):
        y = jax.lax.conv_general_dilated(
            x, w, (1, 1), 'SAME',
            dimension_numbers=('NCHW', 'OIHW', 'NCHW'),
            precision=jax.lax.Precision.HIGHEST)
        return y + b[None, :, None, None]

    def gn(x, gamma, beta):
        N, C, H, W = x.shape
        xg = x.reshape(N, NUM_GROUPS, C // NUM_GROUPS, H, W)
        mean = xg.mean(axis=(2, 3, 4), keepdims=True)
        var = ((xg - mean) ** 2).mean(axis=(2, 3, 4), keepdims=True)
        xn = ((xg - mean) / jnp.sqrt(var + EPS)).reshape(N, C, H, W)
        return xn * gamma[None, :, None, None] + beta[None, :, None, None]

    h = jax.nn.silu(gn(conv(x, w1, b1), g1, be1))
    h2 = jax.nn.silu(gn(conv(h, w2, b2), g2, be2))
    down = jax.lax.reduce_window(h2, -jnp.inf, jax.lax.max,
                                 (1, 1, 2, 2), (1, 1, 2, 2), 'VALID')
    return h2, down


def _make_params(key, in_ch, out_ch):
    ks = jax.random.split(key, 8)
    s1 = 1.0 / math.sqrt(in_ch * 9)
    s2 = 1.0 / math.sqrt(out_ch * 9)
    w1 = jax.random.normal(ks[0], (out_ch, in_ch, 3, 3), jnp.float32) * s1
    b1 = jax.random.normal(ks[1], (out_ch,), jnp.float32) * 0.1
    g1 = 1.0 + 0.1 * jax.random.normal(ks[2], (out_ch,), jnp.float32)
    be1 = 0.1 * jax.random.normal(ks[3], (out_ch,), jnp.float32)
    w2 = jax.random.normal(ks[4], (out_ch, out_ch, 3, 3), jnp.float32) * s2
    b2 = jax.random.normal(ks[5], (out_ch,), jnp.float32) * 0.1
    g2 = 1.0 + 0.1 * jax.random.normal(ks[6], (out_ch,), jnp.float32)
    be2 = 0.1 * jax.random.normal(ks[7], (out_ch,), jnp.float32)
    return (w1, b1, g1, be1, w2, b2, g2, be2)


if __name__ == "__main__":
    key = jax.random.PRNGKey(0)
    kx, kp = jax.random.split(key)

    N, in_ch, out_ch, H, W = 2, 4, 16, 16, 16     # out_ch divisible by 8 groups
    x = jax.random.normal(kx, (N, in_ch, H, W), jnp.float32)
    params = _make_params(kp, in_ch, out_ch)

    x_conv, x_down = down_forward(x, params)
    jax.block_until_ready((x_conv, x_down))

    rc, rd = _ref_forward(x, params)
    err_c = float(jnp.max(jnp.abs(x_conv - rc)))
    err_d = float(jnp.max(jnp.abs(x_down - rd)))
    # bf16 MXU matmuls (f32 accumulation) vs. a full-f32 reference.
    assert err_c < 6e-2 and err_d < 6e-2, (err_c, err_d)

    print("KERNEL_OK")
</pallas_src>

<mosaic_0001>
module attributes {stable_mosaic.version = 11 : i64} {
  func.func @down_kernel(%arg0: i32, %arg1: memref<1x8x256xf32, #tpu.memory_space<vmem>>, %arg2: memref<16x72xbf16, #tpu.memory_space<vmem>>, %arg3: memref<16x144xbf16, #tpu.memory_space<vmem>>, %arg4: memref<16x6xf32, #tpu.memory_space<vmem>>, %arg5: memref<16x16xf32, #tpu.memory_space<vmem>>, %arg6: memref<256x64xf32, #tpu.memory_space<vmem>>, %arg7: memref<1x16x256xf32, #tpu.memory_space<vmem>>, %arg8: memref<1x16x64xf32, #tpu.memory_space<vmem>>, %arg9: memref<8x512xf32, #tpu.memory_space<vmem>>, %arg10: memref<16x512xf32, #tpu.memory_space<vmem>>) attributes {dimension_semantics = [#tpu.dimension_semantics<parallel>], iteration_bounds = array<i64: 2>, scalar_prefetch = 0 : i64, scratch_operands = 2 : i64, tpu.core_type = #tpu.core_type<tc>, window_params = [{transform_indices = @transform_0, window_bounds = array<i64: 1, 8, 256>}, {pipeline_mode = #tpu.pipeline_mode<synchronous>, transform_indices = @transform_1, window_bounds = array<i64: 16, 72>}, {pipeline_mode = #tpu.pipeline_mode<synchronous>, transform_indices = @transform_2, window_bounds = array<i64: 16, 144>}, {pipeline_mode = #tpu.pipeline_mode<synchronous>, transform_indices = @transform_3, window_bounds = array<i64: 16, 6>}, {pipeline_mode = #tpu.pipeline_mode<synchronous>, transform_indices = @transform_4, window_bounds = array<i64: 16, 16>}, {pipeline_mode = #tpu.pipeline_mode<synchronous>, transform_indices = @transform_5, window_bounds = array<i64: 256, 64>}, {transform_indices = @transform_6, window_bounds = array<i64: 1, 16, 256>}, {transform_indices = @transform_7, window_bounds = array<i64: 1, 16, 64>}]} {
    %cst = arith.constant 0.000000e+00 : f32
    %0 = vector.broadcast %cst : f32 to vector<8x17xf32>
    %c0 = arith.constant 0 : index
    %c111 = arith.constant 111 : index
    %1 = vector.load %arg9[%c0, %c111] : memref<8x512xf32, #tpu.memory_space<vmem>>, vector<8x17xf32>
    tpu.vector_store %arg9[%c0, %c111], %0 {strides = array<i32>} : memref<8x512xf32, #tpu.memory_space<vmem>>, vector<8x17xf32>,
    %c0_0 = arith.constant 0 : index
    %c384 = arith.constant 384 : index
    %2 = vector.load %arg9[%c0_0, %c384] : memref<8x512xf32, #tpu.memory_space<vmem>>, vector<8x17xf32>
    tpu.vector_store %arg9[%c0_0, %c384], %0 {strides = array<i32>} : memref<8x512xf32, #tpu.memory_space<vmem>>, vector<8x17xf32>,
    %cst_1 = arith.constant 0.000000e+00 : f32
    %3 = vector.broadcast %cst_1 : f32 to vector<16x17xf32>
    %c0_2 = arith.constant 0 : index
    %c111_3 = arith.constant 111 : index
    %4 = vector.load %arg10[%c0_2, %c111_3] : memref<16x512xf32, #tpu.memory_space<vmem>>, vector<16x17xf32>
    tpu.vector_store %arg10[%c0_2, %c111_3], %3 {strides = array<i32>} : memref<16x512xf32, #tpu.memory_space<vmem>>, vector<16x17xf32>,
    %c0_4 = arith.constant 0 : index
    %c384_5 = arith.constant 384 : index
    %5 = vector.load %arg10[%c0_4, %c384_5] : memref<16x512xf32, #tpu.memory_space<vmem>>, vector<16x17xf32>
    tpu.vector_store %arg10[%c0_4, %c384_5], %3 {strides = array<i32>} : memref<16x512xf32, #tpu.memory_space<vmem>>, vector<16x17xf32>,
    %6 = tpu.iota {dimensions = array<i32: 1>} : vector<1x256xi32>
    %c16_i32 = arith.constant 16 : i32
    %c0_i32 = arith.constant 0 : i32
    %7 = arith.cmpi eq, %c16_i32, %c0_i32 : i32
    %c1_i32 = arith.constant 1 : i32
    %8 = arith.select %7, %c1_i32, %c16_i32 : i32
    %9 = vector.broadcast %8 : i32 to vector<1x256xi32>
    %10 = arith.remsi %6, %9 : vector<1x256xi32>
    %c0_i32_6 = arith.constant 0 : i32
    %11 = vector.broadcast %c0_i32_6 : i32 to vector<1x256xi32>
    %12 = arith.cmpi ne, %10, %11 : vector<1x256xi32>
    %c0_i32_7 = arith.constant 0 : i32
    %13 = vector.broadcast %c0_i32_7 : i32 to vector<1x256xi32>
    %14 = arith.cmpi slt, %10, %13 : vector<1x256xi32>
    %c0_i32_8 = arith.constant 0 : i32
    %15 = arith.cmpi slt, %8, %c0_i32_8 : i32
    %16 = vector.broadcast %15 : i1 to vector<1x256xi1>
    %17 = vector.broadcast %16 : vector<1x256xi1> to vector<1x256xi1>
    %18 = arith.xori %14, %17 : vector<1x256xi1>
    %19 = arith.andi %18, %12 : vector<1x256xi1>
    %20 = vector.broadcast %8 : i32 to vector<1x256xi32>
    %21 = arith.addi %10, %20 : vector<1x256xi32>
    %22 = arith.select %19, %21, %10 : vector<1x256xi1>, vector<1x256xi32>
    %c0_i32_9 = arith.constant 0 : i32
    %23 = vector.broadcast %c0_i32_9 : i32 to vector<1x256xi32>
    %24 = arith.cmpi sgt, %22, %23 : vector<1x256xi32>
    %25 = arith.extui %24 : vector<1x256xi1> to vector<1x256xi32>
    %26 = arith.sitofp %25 : vector<1x256xi32> to vector<1x256xf32>
    %c15_i32 = arith.constant 15 : i32
    %27 = vector.broadcast %c15_i32 : i32 to vector<1x256xi32>
    %28 = arith.cmpi slt, %22, %27 : vector<1x256xi32>
    %29 = arith.extui %28 : vector<1x256xi1> to vector<1x256xi32>
    %30 = arith.sitofp %29 : vector<1x256xi32> to vector<1x256xf32>
    %c0_10 = arith.constant 0 : index
    %c0_11 = arith.constant 0 : index
    %31 = vector.load %arg5[%c0_10, %c0_11] : memref<16x16xf32, #tpu.memory_space<vmem>>, vector<16x16xf32>
    %c0_12 = arith.constant 0 : index
    %c0_13 = arith.constant 0 : index
    %32 = vector.load %arg4[%c0_12, %c0_13] : memref<16x6xf32, #tpu.memory_space<vmem>>, vector<16x6xf32>
    %c0_14 = arith.constant 0 : index
    %c0_15 = arith.constant 0 : index
    %c0_16 = arith.constant 0 : index
    %33 = vector.load %arg1[%c0_14, %c0_15, %c0_16] : memref<1x8x256xf32, #tpu.memory_space<vmem>>, vector<1x8x256xf32>
    %34 = vector.shape_cast %33 : vector<1x8x256xf32> to vector<8x256xf32>
    %c0_17 = arith.constant 0 : index
    %c128 = arith.constant 128 : index
    %35 = vector.load %arg9[%c0_17, %c128] : memref<8x512xf32, #tpu.memory_space<vmem>>, vector<8x256xf32>
    tpu.vector_store %arg9[%c0_17, %c128], %34 {strides = array<i32>} : memref<8x512xf32, #tpu.memory_space<vmem>>, vector<8x256xf32>,
    %c0_18 = arith.constant 0 : index
    %c111_19 = arith.constant 111 : index
    %36 = vector.load %arg9[%c0_18, %c111_19] : memref<8x512xf32, #tpu.memory_space<vmem>>, vector<8x256xf32>
    %37 = vector.broadcast %26 : vector<1x256xf32> to vector<8x256xf32>
    %38 = arith.mulf %36, %37 : vector<8x256xf32>
    %c0_20 = arith.constant 0 : index
    %c112 = arith.constant 112 : index
    %39 = vector.load %arg9[%c0_20, %c112] : memref<8x512xf32, #tpu.memory_space<vmem>>, vector<8x256xf32>
    %c0_21 = arith.constant 0 : index
    %c113 = arith.constant 113 : index
    %40 = vector.load %arg9[%c0_21, %c113] : memref<8x512xf32, #tpu.memory_space<vmem>>, vector<8x256xf32>
    %41 = vector.broadcast %30 : vector<1x256xf32> to vector<8x256xf32>
    %42 = arith.mulf %40, %41 : vector<8x256xf32>
    %c0_22 = arith.constant 0 : index
    %c127 = arith.constant 127 : index
    %43 = vector.load %arg9[%c0_22, %c127] : memref<8x512xf32, #tpu.memory_space<vmem>>, vector<8x256xf32>
    %44 = vector.broadcast %26 : vector<1x256xf32> to vector<8x256xf32>
    %45 = arith.mulf %43, %44 : vector<8x256xf32>
    %c0_23 = arith.constant 0 : index
    %c128_24 = arith.constant 128 : index
    %46 = vector.load %arg9[%c0_23, %c128_24] : memref<8x512xf32, #tpu.memory_space<vmem>>, vector<8x256xf32>
    %c0_25 = arith.constant 0 : index
    %c129 = arith.constant 129 : index
    %47 = vector.load %arg9[%c0_25, %c129] : memref<8x512xf32, #tpu.memory_space<vmem>>, vector<8x256xf32>
    %48 = vector.broadcast %30 : vector<1x256xf32> to vector<8x256xf32>
    %49 = arith.mulf %47, %48 : vector<8x256xf32>
    %c0_26 = arith.constant 0 : index
    %c143 = arith.constant 143 : index
    %50 = vector.load %arg9[%c0_26, %c143] : memref<8x512xf32, #tpu.memory_space<vmem>>, vector<8x256xf32>
    %51 = vector.broadcast %26 : vector<1x256xf32> to vector<8x256xf32>
    %52 = arith.mulf %50, %51 : vector<8x256xf32>
    %c0_27 = arith.constant 0 : index
    %c144 = arith.constant 144 : index
    %53 = vector.load %arg9[%c0_27, %c144] : memref<8x512xf32, #tpu.memory_space<vmem>>, vector<8x256xf32>
    %c0_28 = arith.constant 0 : index
    %c145 = arith.constant 145 : index
    %54 = vector.load %arg9[%c0_28, %c145] : memref<8x512xf32, #tpu.memory_space<vmem>>, vector<8x256xf32>
    %55 = vector.broadcast %30 : vector<1x256xf32> to vector<8x256xf32>
    %56 = arith.mulf %54, %55 : vector<8x256xf32>
    %57 = tpu.concatenate %38, %39, %42, %45, %46, %49, %52, %53, %56 in 0 : vector<8x256xf32>, vector<8x256xf32>, vector<8x256xf32>, vector<8x256xf32>, vector<8x256xf32>, vector<8x256xf32>, vector<8x256xf32>, vector<8x256xf32>, vector<8x256xf32> -> vector<72x256xf32>
    %58 = arith.truncf %57 : vector<72x256xf32> to vector<72x256xbf16>
    %c0_29 = arith.constant 0 : index
    %c0_30 = arith.constant 0 : index
    %59 = vector.load %arg2[%c0_29, %c0_30] : memref<16x72xbf16, #tpu.memory_space<vmem>>, vector<16x72xbf16>
    %cst_31 = arith.constant dense<0.000000e+00> : vector<16x256xf32>
    %60 = tpu.matmul %59, %58, %cst_31 {dimension_numbers = #tpu.dot_dimension_numbers<[1], [0], [0], [1], [0, 0, 1, 1], [], []>} : vector<16x72xbf16>, vector<72x256xbf16>, vector<16x256xf32> -> vector<16x256xf32>
    %61 = vector.extract_strided_slice %32 {offsets = [0, 0], sizes = [16, 1], strides = [1, 1]} : vector<16x6xf32> to vector<16x1xf32>
    %62 = vector.broadcast %61 : vector<16x1xf32> to vector<16x256xf32>
    %63 = arith.addf %60, %62 : vector<16x256xf32>
    %64 = vector.extract_strided_slice %32 {offsets = [0, 1], sizes = [16, 1], strides = [1, 1]} : vector<16x6xf32> to vector<16x1xf32>
    %65 = vector.extract_strided_slice %32 {offsets = [0, 2], sizes = [16, 1], strides = [1, 1]} : vector<16x6xf32> to vector<16x1xf32>
    %cst_32 = arith.constant dense<0.000000e+00> : vector<16x256xf32>
    %66 = tpu.matmul %31, %63, %cst_32 {dimension_numbers = #tpu.dot_dimension_numbers<[1], [0], [0], [1], [0, 0, 1, 1], [], []>} : vector<16x16xf32>, vector<16x256xf32>, vector<16x256xf32> -> vector<16x256xf32>
    %cst_33 = arith.constant dense<0.000000e+00> : vector<16xf32>
    %67 = vector.multi_reduction <add>, %66, %cst_33 [1] : vector<16x256xf32> to vector<16xf32>
    %68 = vector.shape_cast %67 : vector<16xf32> to vector<16x1xf32>
    %cst_34 = arith.constant 3.906250e-03 : f32
    %69 = vector.broadcast %cst_34 : f32 to vector<16x1xf32>
    %70 = arith.mulf %68, %69 : vector<16x1xf32>
    %71 = vector.broadcast %70 : vector<16x1xf32> to vector<16x256xf32>
    %72 = arith.subf %63, %71 : vector<16x256xf32>
    %73 = arith.mulf %72, %72 : vector<16x256xf32>
    %cst_35 = arith.constant dense<0.000000e+00> : vector<16x256xf32>
    %74 = tpu.matmul %31, %73, %cst_35 {dimension_numbers = #tpu.dot_dimension_numbers<[1], [0], [0], [1], [0, 0, 1, 1], [], []>} : vector<16x16xf32>, vector<16x256xf32>, vector<16x256xf32> -> vector<16x256xf32>
    %cst_36 = arith.constant dense<0.000000e+00> : vector<16xf32>
    %75 = vector.multi_reduction <add>, %74, %cst_36 [1] : vector<16x256xf32> to vector<16xf32>
    %76 = vector.shape_cast %75 : vector<16xf32> to vector<16x1xf32>
    %cst_37 = arith.constant 3.906250e-03 : f32
    %77 = vector.broadcast %cst_37 : f32 to vector<16x1xf32>
    %78 = arith.mulf %76, %77 : vector<16x1xf32>
    %cst_38 = arith.constant 9.99999974E-6 : f32
    %79 = vector.broadcast %cst_38 : f32 to vector<16x1xf32>
    %80 = arith.addf %78, %79 : vector<16x1xf32>
    %81 = math.rsqrt %80 : vector<16x1xf32>
    %82 = vector.broadcast %81 : vector<16x1xf32> to vector<16x256xf32>
    %83 = arith.mulf %72, %82 : vector<16x256xf32>
    %84 = vector.broadcast %64 : vector<16x1xf32> to vector<16x256xf32>
    %85 = arith.mulf %83, %84 : vector<16x256xf32>
    %86 = vector.broadcast %65 : vector<16x1xf32> to vector<16x256xf32>
    %87 = arith.addf %85, %86 : vector<16x256xf32>
    %88 = arith.negf %87 : vector<16x256xf32>
    %89 = math.exp %88 : vector<16x256xf32>
    %cst_39 = arith.constant 1.000000e+00 : f32
    %90 = vector.broadcast %cst_39 : f32 to vector<16x256xf32>
    %91 = arith.addf %90, %89 : vector<16x256xf32>
    %92 = arith.divf %90, %91 : vector<16x256xf32>
    %93 = arith.mulf %87, %92 : vector<16x256xf32>
    %c0_40 = arith.constant 0 : index
    %c128_41 = arith.constant 128 : index
    %94 = vector.load %arg10[%c0_40, %c128_41] : memref<16x512xf32, #tpu.memory_space<vmem>>, vector<16x256xf32>
    tpu.vector_store %arg10[%c0_40, %c128_41], %93 {strides = array<i32>} : memref<16x512xf32, #tpu.memory_space<vmem>>, vector<16x256xf32>,
    %c0_42 = arith.constant 0 : index
    %c111_43 = arith.constant 111 : index
    %95 = vector.load %arg10[%c0_42, %c111_43] : memref<16x512xf32, #tpu.memory_space<vmem>>, vector<16x256xf32>
    %96 = vector.broadcast %26 : vector<1x256xf32> to vector<16x256xf32>
    %97 = arith.mulf %95, %96 : vector<16x256xf32>
    %c0_44 = arith.constant 0 : index
    %c112_45 = arith.constant 112 : index
    %98 = vector.load %arg10[%c0_44, %c112_45] : memref<16x512xf32, #tpu.memory_space<vmem>>, vector<16x256xf32>
    %c0_46 = arith.constant 0 : index
    %c113_47 = arith.constant 113 : index
    %99 = vector.load %arg10[%c0_46, %c113_47] : memref<16x512xf32, #tpu.memory_space<vmem>>, vector<16x256xf32>
    %100 = vector.broadcast %30 : vector<1x256xf32> to vector<16x256xf32>
    %101 = arith.mulf %99, %100 : vector<16x256xf32>
    %c0_48 = arith.constant 0 : index
    %c127_49 = arith.constant 127 : index
    %102 = vector.load %arg10[%c0_48, %c127_49] : memref<16x512xf32, #tpu.memory_space<vmem>>, vector<16x256xf32>
    %103 = vector.broadcast %26 : vector<1x256xf32> to vector<16x256xf32>
    %104 = arith.mulf %102, %103 : vector<16x256xf32>
    %c0_50 = arith.constant 0 : index
    %c128_51 = arith.constant 128 : index
    %105 = vector.load %arg10[%c0_50, %c128_51] : memref<16x512xf32, #tpu.memory_space<vmem>>, vector<16x256xf32>
    %c0_52 = arith.constant 0 : index
    %c129_53 = arith.constant 129 : index
    %106 = vector.load %arg10[%c0_52, %c129_53] : memref<16x512xf32, #tpu.memory_space<vmem>>, vector<16x256xf32>
    %107 = vector.broadcast %30 : vector<1x256xf32> to vector<16x256xf32>
    %108 = arith.mulf %106, %107 : vector<16x256xf32>
    %c0_54 = arith.constant 0 : index
    %c143_55 = arith.constant 143 : index
    %109 = vector.load %arg10[%c0_54, %c143_55] : memref<16x512xf32, #tpu.memory_space<vmem>>, vector<16x256xf32>
    %110 = vector.broadcast %26 : vector<1x256xf32> to vector<16x256xf32>
    %111 = arith.mulf %109, %110 : vector<16x256xf32>
    %c0_56 = arith.constant 0 : index
    %c144_57 = arith.constant 144 : index
    %112 = vector.load %arg10[%c0_56, %c144_57] : memref<16x512xf32, #tpu.memory_space<vmem>>, vector<16x256xf32>
    %c0_58 = arith.constant 0 : index
    %c145_59 = arith.constant 145 : index
    %113 = vector.load %arg10[%c0_58, %c145_59] : memref<16x512xf32, #tpu.memory_space<vmem>>, vector<16x256xf32>
    %114 = vector.broadcast %30 : vector<1x256xf32> to vector<16x256xf32>
    %115 = arith.mulf %113, %114 : vector<16x256xf32>
    %116 = tpu.concatenate %97, %98, %101, %104, %105, %108, %111, %112, %115 in 0 : vector<16x256xf32>, vector<16x256xf32>, vector<16x256xf32>, vector<16x256xf32>, vector<16x256xf32>, vector<16x256xf32>, vector<16x256xf32>, vector<16x256xf32>, vector<16x256xf32> -> vector<144x256xf32>
    %117 = arith.truncf %116 : vector<144x256xf32> to vector<144x256xbf16>
    %c0_60 = arith.constant 0 : index
    %c0_61 = arith.constant 0 : index
    %118 = vector.load %arg3[%c0_60, %c0_61] : memref<16x144xbf16, #tpu.memory_space<vmem>>, vector<16x144xbf16>
    %cst_62 = arith.constant dense<0.000000e+00> : vector<16x256xf32>
    %119 = tpu.matmul %118, %117, %cst_62 {dimension_numbers = #tpu.dot_dimension_numbers<[1], [0], [0], [1], [0, 0, 1, 1], [], []>} : vector<16x144xbf16>, vector<144x256xbf16>, vector<16x256xf32> -> vector<16x256xf32>
    %120 = vector.extract_strided_slice %32 {offsets = [0, 3], sizes = [16, 1], strides = [1, 1]} : vector<16x6xf32> to vector<16x1xf32>
    %121 = vector.broadcast %120 : vector<16x1xf32> to vector<16x256xf32>
    %122 = arith.addf %119, %121 : vector<16x256xf32>
    %123 = vector.extract_strided_slice %32 {offsets = [0, 4], sizes = [16, 1], strides = [1, 1]} : vector<16x6xf32> to vector<16x1xf32>
    %124 = vector.extract_strided_slice %32 {offsets = [0, 5], sizes = [16, 1], strides = [1, 1]} : vector<16x6xf32> to vector<16x1xf32>
    %cst_63 = arith.constant dense<0.000000e+00> : vector<16x256xf32>
    %125 = tpu.matmul %31, %122, %cst_63 {dimension_numbers = #tpu.dot_dimension_numbers<[1], [0], [0], [1], [0, 0, 1, 1], [], []>} : vector<16x16xf32>, vector<16x256xf32>, vector<16x256xf32> -> vector<16x256xf32>
    %cst_64 = arith.constant dense<0.000000e+00> : vector<16xf32>
    %126 = vector.multi_reduction <add>, %125, %cst_64 [1] : vector<16x256xf32> to vector<16xf32>
    %127 = vector.shape_cast %126 : vector<16xf32> to vector<16x1xf32>
    %cst_65 = arith.constant 3.906250e-03 : f32
    %128 = vector.broadcast %cst_65 : f32 to vector<16x1xf32>
    %129 = arith.mulf %127, %128 : vector<16x1xf32>
    %130 = vector.broadcast %129 : vector<16x1xf32> to vector<16x256xf32>
    %131 = arith.subf %122, %130 : vector<16x256xf32>
    %132 = arith.mulf %131, %131 : vector<16x256xf32>
    %cst_66 = arith.constant dense<0.000000e+00> : vector<16x256xf32>
    %133 = tpu.matmul %31, %132, %cst_66 {dimension_numbers = #tpu.dot_dimension_numbers<[1], [0], [0], [1], [0, 0, 1, 1], [], []>} : vector<16x16xf32>, vector<16x256xf32>, vector<16x256xf32> -> vector<16x256xf32>
    %cst_67 = arith.constant dense<0.000000e+00> : vector<16xf32>
    %134 = vector.multi_reduction <add>, %133, %cst_67 [1] : vector<16x256xf32> to vector<16xf32>
    %135 = vector.shape_cast %134 : vector<16xf32> to vector<16x1xf32>
    %cst_68 = arith.constant 3.906250e-03 : f32
    %136 = vector.broadcast %cst_68 : f32 to vector<16x1xf32>
    %137 = arith.mulf %135, %136 : vector<16x1xf32>
    %cst_69 = arith.constant 9.99999974E-6 : f32
    %138 = vector.broadcast %cst_69 : f32 to vector<16x1xf32>
    %139 = arith.addf %137, %138 : vector<16x1xf32>
    %140 = math.rsqrt %139 : vector<16x1xf32>
    %141 = vector.broadcast %140 : vector<16x1xf32> to vector<16x256xf32>
    %142 = arith.mulf %131, %141 : vector<16x256xf32>
    %143 = vector.broadcast %123 : vector<16x1xf32> to vector<16x256xf32>
    %144 = arith.mulf %142, %143 : vector<16x256xf32>
    %145 = vector.broadcast %124 : vector<16x1xf32> to vector<16x256xf32>
    %146 = arith.addf %144, %145 : vector<16x256xf32>
    %147 = arith.negf %146 : vector<16x256xf32>
    %148 = math.exp %147 : vector<16x256xf32>
    %cst_70 = arith.constant 1.000000e+00 : f32
    %149 = vector.broadcast %cst_70 : f32 to vector<16x256xf32>
    %150 = arith.addf %149, %148 : vector<16x256xf32>
    %151 = arith.divf %149, %150 : vector<16x256xf32>
    %152 = arith.mulf %146, %151 : vector<16x256xf32>
    %c0_71 = arith.constant 0 : index
    %c0_72 = arith.constant 0 : index
    %c0_73 = arith.constant 0 : index
    %153 = vector.load %arg7[%c0_71, %c0_72, %c0_73] : memref<1x16x256xf32, #tpu.memory_space<vmem>>, vector<1x16x256xf32>
    %154 = vector.shape_cast %153 : vector<1x16x256xf32> to vector<16x256xf32>
    %155 = vector.shape_cast %152 : vector<16x256xf32> to vector<1x16x256xf32>
    tpu.vector_store %arg7[%c0_71, %c0_72, %c0_73], %155 {strides = array<i32>} : memref<1x16x256xf32, #tpu.memory_space<vmem>>, vector<1x16x256xf32>,
    %c0_74 = arith.constant 0 : index
    %c128_75 = arith.constant 128 : index
    %156 = vector.load %arg10[%c0_74, %c128_75] : memref<16x512xf32, #tpu.memory_space<vmem>>, vector<16x256xf32>
    tpu.vector_store %arg10[%c0_74, %c128_75], %152 {strides = array<i32>} : memref<16x512xf32, #tpu.memory_space<vmem>>, vector<16x256xf32>,
    %c0_76 = arith.constant 0 : index
    %c129_77 = arith.constant 129 : index
    %157 = vector.load %arg10[%c0_76, %c129_77] : memref<16x512xf32, #tpu.memory_space<vmem>>, vector<16x256xf32>
    %158 = arith.maximumf %152, %157 : vector<16x256xf32>
    %c0_78 = arith.constant 0 : index
    %c144_79 = arith.constant 144 : index
    %159 = vector.load %arg10[%c0_78, %c144_79] : memref<16x512xf32, #tpu.memory_space<vmem>>, vector<16x256xf32>
    %c0_80 = arith.constant 0 : index
    %c145_81 = arith.constant 145 : index
    %160 = vector.load %arg10[%c0_80, %c145_81] : memref<16x512xf32, #tpu.memory_space<vmem>>, vector<16x256xf32>
    %161 = arith.maximumf %159, %160 : vector<16x256xf32>
    %162 = arith.maximumf %158, %161 : vector<16x256xf32>
    %c0_82 = arith.constant 0 : index
    %c0_83 = arith.constant 0 : index
    %163 = vector.load %arg6[%c0_82, %c0_83] : memref<256x64xf32, #tpu.memory_space<vmem>>, vector<256x64xf32>
    %cst_84 = arith.constant dense<0.000000e+00> : vector<16x64xf32>
    %164 = tpu.matmul %162, %163, %cst_84 {dimension_numbers = #tpu.dot_dimension_numbers<[1], [0], [0], [1], [0, 0, 1, 1], [], []>} : vector<16x256xf32>, vector<256x64xf32>, vector<16x64xf32> -> vector<16x64xf32>
    %c0_85 = arith.constant 0 : index
    %c0_86 = arith.constant 0 : index
    %c0_87 = arith.constant 0 : index
    %165 = vector.load %arg8[%c0_85, %c0_86, %c0_87] : memref<1x16x64xf32, #tpu.memory_space<vmem>>, vector<1x16x64xf32>
    %166 = vector.shape_cast %165 : vector<1x16x64xf32> to vector<16x64xf32>
    %167 = vector.shape_cast %164 : vector<16x64xf32> to vector<1x16x64xf32>
    tpu.vector_store %arg8[%c0_85, %c0_86, %c0_87], %167 {strides = array<i32>} : memref<1x16x64xf32, #tpu.memory_space<vmem>>, vector<1x16x64xf32>,
    return
  }
  func.func @transform_0(%arg0: i32) -> (i32, i32, i32) {
    %c0_i32 = arith.constant 0 : i32
    %c0_i32_0 = arith.constant 0 : i32
    %c0_i32_1 = arith.constant 0 : i32
    return %arg0, %c0_i32, %c0_i32_0 : i32, i32, i32
  }
  func.func @transform_1(%arg0: i32) -> (i32, i32) {
    %c0_i32 = arith.constant 0 : i32
    %c0_i32_0 = arith.constant 0 : i32
    %c0_i32_1 = arith.constant 0 : i32
    return %c0_i32, %c0_i32_0 : i32, i32
  }
  func.func @transform_2(%arg0: i32) -> (i32, i32) {
    %c0_i32 = arith.constant 0 : i32
    %c0_i32_0 = arith.constant 0 : i32
    %c0_i32_1 = arith.constant 0 : i32
    return %c0_i32, %c0_i32_0 : i32, i32
  }
  func.func @transform_3(%arg0: i32) -> (i32, i32) {
    %c0_i32 = arith.constant 0 : i32
    %c0_i32_0 = arith.constant 0 : i32
    %c0_i32_1 = arith.constant 0 : i32
    return %c0_i32, %c0_i32_0 : i32, i32
  }
  func.func @transform_4(%arg0: i32) -> (i32, i32) {
    %c0_i32 = arith.constant 0 : i32
    %c0_i32_0 = arith.constant 0 : i32
    %c0_i32_1 = arith.constant 0 : i32
    return %c0_i32, %c0_i32_0 : i32, i32
  }
  func.func @transform_5(%arg0: i32) -> (i32, i32) {
    %c0_i32 = arith.constant 0 : i32
    %c0_i32_0 = arith.constant 0 : i32
    %c0_i32_1 = arith.constant 0 : i32
    return %c0_i32, %c0_i32_0 : i32, i32
  }
  func.func @transform_6(%arg0: i32) -> (i32, i32, i32) {
    %c0_i32 = arith.constant 0 : i32
    %c0_i32_0 = arith.constant 0 : i32
    %c0_i32_1 = arith.constant 0 : i32
    return %arg0, %c0_i32, %c0_i32_0 : i32, i32, i32
  }
  func.func @transform_7(%arg0: i32) -> (i32, i32, i32) {
    %c0_i32 = arith.constant 0 : i32
    %c0_i32_0 = arith.constant 0 : i32
    %c0_i32_1 = arith.constant 0 : i32
    return %arg0, %c0_i32, %c0_i32_0 : i32, i32, i32
  }
}

</mosaic_0001>

<llo_original>
// kernel: tpu_custom_call.1
$region0: #{tpu_custom_call.1}
  #allocation0 [shape = 'u32[]', space=smem, size = 0x4, offset = 0x4, fixed_abs, tag = 'smem constant byte address 0x4 - core index']
  #allocation1 [shape = 'u32[72,128]{1,0:T(1,128)}', space=vmem, size = 0x9000, scoped, tag = 'internal scratch']
  #allocation2 [shape = 'f32[8,512]{1,0:T(8,128)}', space=vmem, size = 0x4000, scoped, tag = 'scratch operand']
  #allocation3 [shape = 'f32[16,512]{1,0:T(8,128)}', space=vmem, size = 0x8000, scoped, tag = 'scratch operand']
  %s0 = inlined_call_operand.vmem [shape: f32[2,8,256], index: 0, kind: input, shape index: {}]
  %s1 = inlined_call_operand.vmem [shape: bf16[16,72], index: 1, kind: input, shape index: {}]
  %s2 = inlined_call_operand.vmem [shape: bf16[16,144], index: 2, kind: input, shape index: {}]
  %s3 = inlined_call_operand.vmem [shape: f32[16,6], index: 3, kind: input, shape index: {}]
  %s4 = inlined_call_operand.vmem [shape: f32[16,16], index: 4, kind: input, shape index: {}]
  %s5 = inlined_call_operand.vmem [shape: f32[256,64], index: 5, kind: input, shape index: {}]
  %s6 = inlined_call_operand.hbm [shape: f32[2,16,256], index: 6, kind: output, shape index: {0}]
  %s7 = inlined_call_operand.hbm [shape: f32[2,16,64], index: 7, kind: output, shape index: {1}]
  %8 = xla_tuple %s6, %s7
  %s9 = sld [smem:[#allocation0]]
  $region65: #{tpu_custom_call.1} parent=0
    _
  %s11 = ssub.s32 1, %s9
  %s12 = scalar_select 0, %s11, %s9
  $region1: #{tpu_custom_call.1} parent=0
    #allocation4 [shape = 'u8[32768]{0}', space=vmem, size = 0x8000, scoped, tag = 'output window, operand 0']
    #allocation5 [shape = 's32[2]{0}', space=sflag, size = 0x8, scoped, tag = 'scoped memory for tpu_custom_call.1']
    #allocation6 [shape = 'u8[16384]{0}', space=vmem, size = 0x4000, scoped, tag = 'output window, operand 1']
    #allocation7 [shape = 's32[2]{0}', space=sflag, size = 0x8, scoped, tag = 'scoped memory for tpu_custom_call.1']
    %13 = vsyncpa [#allocation5], 0
    %s14 = scalar_lea.sflag [#allocation5], 1
    %15 = vsyncpa %s14, 0
    %16 = vsyncpa [#allocation7], 0
    %s17 = scalar_lea.sflag [#allocation7], 1
    %18 = vsyncpa %s17, 0
    loop: start=0, step=1, limit=4
    $region2: #{tpu_custom_call.1} parent=1 // loop_pre_header
      _
    $region3: #{tpu_custom_call.1} parent=1 // loop_header
      %s20 = sphi 0, %s24
      %p21 = scmp.ge.s32.totalorder %s20, 4
      %s30 = sphi 0, %s32
      %s33 = sphi 0, %s30
      %s34 = sphi 0, %s33
      %s50 = sphi 0, %s34
      %s54 = sphi 0, %s54
      %s56 = sphi 0, %s54
      %s57 = sphi 0, %s56
      %s71 = sphi 0, %s57
      %s75 = sphi 0, %s75
      %s77 = sphi 0, %s75
      %s78 = sphi 0, %s77
      %s92 = sphi 0, %s78
      %s96 = sphi 0, %s96
      %s98 = sphi 0, %s96
      %s99 = sphi 0, %s98
      %s113 = sphi 0, %s99
      %s117 = sphi 0, %s117
      %s119 = sphi 0, %s117
      %s120 = sphi 0, %s119
      %s134 = sphi 0, %s120
      %s138 = sphi 0, %s138
      %s140 = sphi 0, %s138
      %s141 = sphi 0, %s140
      %s155 = sphi 0, %s141
      %s161 = sphi 0, %s163
      %s164 = sphi 0, %s161
      %s165 = sphi 0, %s164
      %s181 = sphi 0, %s165
      %s187 = sphi 0, %s189
      %s190 = sphi 0, %s187
      %s191 = sphi 0, %s190
      %s207 = sphi 0, %s191
    $region4: #{tpu_custom_call.1} parent=1 // loop_header_branch
      %23 = sbr.rel (%p21) target = $region8
    $region5: #{tpu_custom_call.1} parent=1 // loop_body
      %s25 = ssub.s32 %s20, 1
      %s26 = ssub.s32 %s20, 2
      %s27 = sadd.s32 %s20, 1
      %s28 = ssub.s32 %s20, %s27
      %p29 = scmp.eq.s32.totalorder %s28, 0
      %s31 = sadd.s32 %s30, 1
      %s32 = scalar_select %p29, %s30, %s31
      %p35 = pneg %p29
      %p36 = scmp.eq.s32.totalorder %s20, 1
      %p37 = por %p35, %p36
      %p38 = scmp.ne.s32.totalorder %s30, %s33
      %p39 = scmp.eq.s32.totalorder %s20, 0
      %p40 = por %p38, %p39
      %p41 = scmp.ne.s32.totalorder %s30, %s33
      %p42 = scmp.eq.s32.totalorder %s25, 1
      %p43 = por %p41, %p42
      %p44 = scmp.ne.s32.totalorder %s33, %s34
      %p45 = scmp.eq.s32.totalorder %s25, 0
      %p46 = por %p44, %p45
      %p47 = scmp.ne.s32.totalorder %s33, %s34
      %p48 = scmp.eq.s32.totalorder %s26, 1
      %p49 = por %p47, %p48
      %p51 = scmp.ne.s32.totalorder %s34, %s50
      %p52 = scmp.eq.s32.totalorder %s26, 0
      %p53 = por %p51, %p52
      %s55 = sadd.s32 %s54, 1
      %p58 = scmp.eq.s32.totalorder %s20, 1
      %p59 = scmp.ne.s32.totalorder %s54, %s56
      %p60 = scmp.eq.s32.totalorder %s20, 0
      %p61 = por %p59, %p60
      %p62 = scmp.ne.s32.totalorder %s54, %s56
      %p63 = scmp.eq.s32.totalorder %s25, 1
      %p64 = por %p62, %p63
      %p65 = scmp.ne.s32.totalorder %s56, %s57
      %p66 = scmp.eq.s32.totalorder %s25, 0
      %p67 = por %p65, %p66
      %p68 = scmp.ne.s32.totalorder %s56, %s57
      %p69 = scmp.eq.s32.totalorder %s26, 1
      %p70 = por %p68, %p69
      %p72 = scmp.ne.s32.totalorder %s57, %s71
      %p73 = scmp.eq.s32.totalorder %s26, 0
      %p74 = por %p72, %p73
      %s76 = sadd.s32 %s75, 1
      %p79 = scmp.eq.s32.totalorder %s20, 1
      %p80 = scmp.ne.s32.totalorder %s75, %s77
      %p81 = scmp.eq.s32.totalorder %s20, 0
      %p82 = por %p80, %p81
      %p83 = scmp.ne.s32.totalorder %s75, %s77
      %p84 = scmp.eq.s32.totalorder %s25, 1
      %p85 = por %p83, %p84
      %p86 = scmp.ne.s32.totalorder %s77, %s78
      %p87 = scmp.eq.s32.totalorder %s25, 0
      %p88 = por %p86, %p87
      %p89 = scmp.ne.s32.totalorder %s77, %s78
      %p90 = scmp.eq.s32.totalorder %s26, 1
      %p91 = por %p89, %p90
      %p93 = scmp.ne.s32.totalorder %s78, %s92
      %p94 = scmp.eq.s32.totalorder %s26, 0
      %p95 = por %p93, %p94
      %s97 = sadd.s32 %s96, 1
      %p100 = scmp.eq.s32.totalorder %s20, 1
      %p101 = scmp.ne.s32.totalorder %s96, %s98
      %p102 = scmp.eq.s32.totalorder %s20, 0
      %p103 = por %p101, %p102
      %p104 = scmp.ne.s32.totalorder %s96, %s98
      %p105 = scmp.eq.s32.totalorder %s25, 1
      %p106 = por %p104, %p105
      %p107 = scmp.ne.s32.totalorder %s98, %s99
      %p108 = scmp.eq.s32.totalorder %s25, 0
      %p109 = por %p107, %p108
      %p110 = scmp.ne.s32.totalorder %s98, %s99
      %p111 = scmp.eq.s32.totalorder %s26, 1
      %p112 = por %p110, %p111
      %p114 = scmp.ne.s32.totalorder %s99, %s113
      %p115 = scmp.eq.s32.totalorder %s26, 0
      %p116 = por %p114, %p115
      %s118 = sadd.s32 %s117, 1
      %p121 = scmp.eq.s32.totalorder %s20, 1
      %p122 = scmp.ne.s32.totalorder %s117, %s119
      %p123 = scmp.eq.s32.totalorder %s20, 0
      %p124 = por %p122, %p123
      %p125 = scmp.ne.s32.totalorder %s117, %s119
      %p126 = scmp.eq.s32.totalorder %s25, 1
      %p127 = por %p125, %p126
      %p128 = scmp.ne.s32.totalorder %s119, %s120
      %p129 = scmp.eq.s32.totalorder %s25, 0
      %p130 = por %p128, %p129
      %p131 = scmp.ne.s32.totalorder %s119, %s120
      %p132 = scmp.eq.s32.totalorder %s26, 1
      %p133 = por %p131, %p132
      %p135 = scmp.ne.s32.totalorder %s120, %s134
      %p136 = scmp.eq.s32.totalorder %s26, 0
      %p137 = por %p135, %p136
      %s139 = sadd.s32 %s138, 1
      %p142 = scmp.eq.s32.totalorder %s20, 1
      %p143 = scmp.ne.s32.totalorder %s138, %s140
      %p144 = scmp.eq.s32.totalorder %s20, 0
      %p145 = por %p143, %p144
      %p146 = scmp.ne.s32.totalorder %s138, %s140
      %p147 = scmp.eq.s32.totalorder %s25, 1
      %p148 = por %p146, %p147
      %p149 = scmp.ne.s32.totalorder %s140, %s141
      %p150 = scmp.eq.s32.totalorder %s25, 0
      %p151 = por %p149, %p150
      %p152 = scmp.ne.s32.totalorder %s140, %s141
      %p153 = scmp.eq.s32.totalorder %s26, 1
      %p154 = por %p152, %p153
      %p156 = scmp.ne.s32.totalorder %s141, %s155
      %p157 = scmp.eq.s32.totalorder %s26, 0
      %p158 = por %p156, %p157
      %s159 = ssub.s32 %s20, %s27
      %p160 = scmp.eq.s32.totalorder %s159, 0
      %s162 = sadd.s32 %s161, 1
      %s163 = scalar_select %p160, %s161, %s162
      %p166 = pneg %p160
      %p167 = scmp.eq.s32.totalorder %s20, 1
      %p168 = por %p166, %p167
      %p169 = scmp.ne.s32.totalorder %s161, %s164
      %p170 = scmp.eq.s32.totalorder %s20, 0
      %p171 = por %p169, %p170
      %p172 = scmp.ne.s32.totalorder %s161, %s164
      %p173 = scmp.eq.s32.totalorder %s25, 1
      %p174 = por %p172, %p173
      %p175 = scmp.ne.s32.totalorder %s164, %s165
      %p176 = scmp.eq.s32.totalorder %s25, 0
      %p177 = por %p175, %p176
      %p178 = scmp.ne.s32.totalorder %s164, %s165
      %p179 = scmp.eq.s32.totalorder %s26, 1
      %p180 = por %p178, %p179
      %p182 = scmp.ne.s32.totalorder %s165, %s181
      %p183 = scmp.eq.s32.totalorder %s26, 0
      %p184 = por %p182, %p183
      %s185 = ssub.s32 %s20, %s27
      %p186 = scmp.eq.s32.totalorder %s185, 0
      %s188 = sadd.s32 %s187, 1
      %s189 = scalar_select %p186, %s187, %s188
      %p192 = pneg %p186
      %p193 = scmp.eq.s32.totalorder %s20, 1
      %p194 = por %p192, %p193
      %p195 = scmp.ne.s32.totalorder %s187, %s190
      %p196 = scmp.eq.s32.totalorder %s20, 0
      %p197 = por %p195, %p196
      %p198 = scmp.ne.s32.totalorder %s187, %s190
      %p199 = scmp.eq.s32.totalorder %s25, 1
      %p200 = por %p198, %p199
      %p201 = scmp.ne.s32.totalorder %s190, %s191
      %p202 = scmp.eq.s32.totalorder %s25, 0
      %p203 = por %p201, %p202
      %p204 = scmp.ne.s32.totalorder %s190, %s191
      %p205 = scmp.eq.s32.totalorder %s26, 1
      %p206 = por %p204, %p205
      %p208 = scmp.ne.s32.totalorder %s191, %s207
      %p209 = scmp.eq.s32.totalorder %s26, 0
      %p210 = por %p208, %p209
      %p211 = scmp.le.s32.totalorder 1, %s20
      %p212 = scmp.lt.s32.totalorder %s20, 3
      %p213 = pnand %p211, %p212
      %p214 = pneg %p213
      // Predicated region
      $region9: #{tpu_custom_call.1} parent=5 // pred_check
        _
      $region10: #{tpu_custom_call.1} parent=5 // pred_check_branch
        %216 = sbr.rel (%p213) target = $region12
      $region11: #{tpu_custom_call.1} parent=5 // pred_region
        %s217 = ssub.s32 %s20, 1
        // Predicated region
        $region13: #{tpu_custom_call.1} parent=11 // pred_check
          %p218 = pneg %p67
        $region14: #{tpu_custom_call.1} parent=11 // pred_check_branch
          %220 = sbr.rel (%p218) target = $region16
        $region15: #{tpu_custom_call.1} parent=11 // pred_region
          _
        $region16: #{tpu_custom_call.1} parent=11 // pred_fallthru
          _
        // Predicated region
        $region17: #{tpu_custom_call.1} parent=11 // pred_check
          %p221 = pneg %p88
        $region18: #{tpu_custom_call.1} parent=11 // pred_check_branch
          %223 = sbr.rel (%p221) target = $region20
        $region19: #{tpu_custom_call.1} parent=11 // pred_region
          _
        $region20: #{tpu_custom_call.1} parent=11 // pred_fallthru
          _
        // Predicated region
        $region21: #{tpu_custom_call.1} parent=11 // pred_check
          %p224 = pneg %p109
        $region22: #{tpu_custom_call.1} parent=11 // pred_check_branch
          %226 = sbr.rel (%p224) target = $region24
        $region23: #{tpu_custom_call.1} parent=11 // pred_region
          _
        $region24: #{tpu_custom_call.1} parent=11 // pred_fallthru
          _
        // Predicated region
        $region25: #{tpu_custom_call.1} parent=11 // pred_check
          %p227 = pneg %p130
        $region26: #{tpu_custom_call.1} parent=11 // pred_check_branch
          %229 = sbr.rel (%p227) target = $region28
        $region27: #{tpu_custom_call.1} parent=11 // pred_region
          _
        $region28: #{tpu_custom_call.1} parent=11 // pred_fallthru
          _
        // Predicated region
        $region29: #{tpu_custom_call.1} parent=11 // pred_check
          %p230 = pneg %p151
        $region30: #{tpu_custom_call.1} parent=11 // pred_check_branch
          %232 = sbr.rel (%p230) target = $region32
        $region31: #{tpu_custom_call.1} parent=11 // pred_region
          _
        $region32: #{tpu_custom_call.1} parent=11 // pred_fallthru
          _
      $region12: #{tpu_custom_call.1} parent=5 // pred_fallthru
        _
      %p233 = scmp.lt.s32.totalorder %s20, 2
      // Predicated region
      $region33: #{tpu_custom_call.1} parent=5 // pred_check
        %p234 = pneg %p233
      $region34: #{tpu_custom_call.1} parent=5 // pred_check_branch
        %236 = sbr.rel (%p234) target = $region36
      $region35: #{tpu_custom_call.1} parent=5 // pred_region
        // Predicated region
        $region37: #{tpu_custom_call.1} parent=35 // pred_check
          %p237 = pneg %p40
        $region38: #{tpu_custom_call.1} parent=35 // pred_check_branch
          %239 = sbr.rel (%p237) target = $region40
        $region39: #{tpu_custom_call.1} parent=35 // pred_region
          %p240 = scmp.lt.s32.totalorder %s20, 1
          %s241 = scalar_select %p240, %s20, 1
          %s242 = smul.addr %s241, 2
          %s243 = smul.addr %s242, 8
          %s244 = scalar_lea.vmem %s0, %s243
        $region40: #{tpu_custom_call.1} parent=35 // pred_fallthru
          _
      $region36: #{tpu_custom_call.1} parent=5 // pred_fallthru
        _
      %p245 = scmp.le.s32.totalorder 1, %s20
      %p246 = scmp.lt.s32.totalorder %s20, 3
      %p247 = pnand %p245, %p246
      %p248 = pneg %p247
      // Predicated region
      $region41: #{tpu_custom_call.1} parent=5 // pred_check
        _
      $region42: #{tpu_custom_call.1} parent=5 // pred_check_branch
        %250 = sbr.rel (%p247) target = $region44
      $region43: #{tpu_custom_call.1} parent=5 // pred_region
        %s251 = ssub.s32 %s20, 1
        %p252 = scmp.lt.s32.totalorder %s25, 1
        %s253 = scalar_select %p252, %s25, 1
        %s254 = smul.addr %s253, 2
        %s255 = smul.addr %s254, 8
        %s256 = scalar_lea.vmem %s0, %s255
        %p257 = pneg %p46
        %p258 = pneg %p43
        %p259 = pneg %p67
        %p260 = pneg %p64
        %p261 = pneg %p88
        %p262 = pneg %p85
        %p263 = pneg %p109
        %p264 = pneg %p106
        %p265 = pneg %p130
        %p266 = pneg %p127
        %p267 = pneg %p151
        %p268 = pneg %p148
        %p269 = pneg %p177
        %p270 = pneg %p174
        %s271 = sand.u32 %s164, 1
        %s272 = scalar_lea.sflag [#allocation5], %s271
        %s273 = sand.u32 %s164, 1
        %s274 = smul.addr %s273, 32
        %s275 = scalar_lea.vmem [#allocation4], %s274
        %p276 = pneg %p203
        %p277 = pneg %p200
        %s278 = sand.u32 %s190, 1
        %s279 = scalar_lea.sflag [#allocation7], %s278
        %s280 = sand.u32 %s190, 1
        %s281 = smul.addr %s280, 16
        %s282 = scalar_lea.vmem [#allocation6], %s281
        %p283 = scmp.lt.s32.totalorder %s25, 1
        %s284 = scalar_select %p283, %s25, 1
        %s285 = smul.addr %s284, 2
        %s286 = smul.addr %s285, 8
        %s287 = scalar_lea.vmem %s0, %s286
        %vm289 = vcmask 1048440
        %290 = vst.msk [vmem:[#allocation2] sm:$0xff] %vm289, 0.0
        %vm291 = vcmask 138240
        %292 = vst.msk [vmem:[#allocation2 + $0x18] sm:$0xff] %vm291, 0.0
        %293 = vst.msk [vmem:[#allocation3] sm:$0xff] %vm289, 0.0
        %294 = vst.msk [vmem:[#allocation3 + $0x20] sm:$0xff] %vm289, 0.0
        %295 = vst.msk [vmem:[#allocation3 + $0x18] sm:$0xff] %vm291, 0.0
        %296 = vst.msk [vmem:[#allocation3 + $0x38] sm:$0xff] %vm291, 0.0
        %v297 = vlaneseq
        %v298 = vand.u32 %v297, 127
        %v299 = vadd.s32 %v298, 128
        %vm300 = vcmp.lt.s32.totalorder %v298, 0
        %v301 = vsub.s32 0, %v298
        %v302 = vsel %vm300, %v301, %v298
        %v303 = vshrl.u32 %v302, 4
        %v304 = vand.u32 %v302, 15
        %v305 = vsub.s32 0, %v304
        %v306 = vsel %vm300, %v305, %v304
        %vm307 = vcmp.lt.s32.totalorder %v299, 0
        %v308 = vsub.s32 0, %v299
        %v309 = vsel %vm307, %v308, %v299
        %v310 = vshrl.u32 %v309, 4
        %v311 = vand.u32 %v309, 15
        %v312 = vsub.s32 0, %v311
        %v313 = vsel %vm307, %v312, %v311
        %vm314 = vcmp.ne.s32.totalorder %v306, 0
        %vm315 = vcmp.ne.s32.totalorder %v313, 0
        %vm316 = vcmp.lt.s32.totalorder %v306, 0
        %vm317 = vcmp.lt.s32.totalorder %v313, 0
        %vm318 = vmand %vm316, %vm314
        %vm319 = vmand %vm317, %vm315
        %v320 = vadd.s32 %v306, 16
        %v321 = vadd.s32 %v313, 16
        %v322 = vsel %vm318, %v320, %v306
        %v323 = vsel %vm319, %v321, %v313
        %vm324 = vcmp.gt.s32.totalorder %v322, 0
        %vm325 = vcmp.gt.s32.totalorder %v323, 0
        %v326 = vsel %vm324, 1, 0
        %v327 = vsel %vm325, 1, 0
        %v328 = vcvt.s32.f32 %v326
        %v329 = vcvt.s32.f32 %v327
        %vm330 = vcmp.lt.s32.totalorder %v322, 15
        %vm331 = vcmp.lt.s32.totalorder %v323, 15
        %v332 = vsel %vm330, 1, 0
        %v333 = vsel %vm331, 1, 0
        %v334 = vcvt.s32.f32 %v332
        %v335 = vcvt.s32.f32 %v333
        %v336 = vld [vmem:[%s4] sm:$0xff]
        %v337 = vld [vmem:[%s4 + $0x8] sm:$0xff]
        %v338 = vld [vmem:[%s3] sm:$0xff]
        %v339 = vld [vmem:[%s3 + $0x8] sm:$0xff]
        %v340 = vld [vmem:[%s287] sm:$0xff]
        %v341 = vld [vmem:[%s287 + $0x8] sm:$0xff]
        %342 = vst [vmem:[#allocation2 + $0x8] sm:$0xff] %v340
        %343 = vst [vmem:[#allocation2 + $0x10] sm:$0xff] %v341
        %v344 = vld [vmem:[#allocation2] sm:$0xff]
        %v345 = vld [vmem:[#allocation2 + $0x8] sm:$0xff]
        %v346 = vld [vmem:[#allocation2 + $0x10] sm:$0xff]
        %349 = vrot.lane.b32.xlu0 %v328, 111
        %v350 = vpop.permute.xlu0 %349
        %351 = vrot.lane.b32.xlu0 %v329, 111
        %v352 = vpop.permute.xlu0 %351
        %vm353 = vcmask 908288
        %v354 = vsel %vm353, %v350, %v352
        %v358 = vmul.f32 %v344, %v350
        %v359 = vmul.f32 %v345, %v354
        %v360 = vmul.f32 %v346, %v352
        %363 = vrot.lane.b32.xlu0 %v334, 113
        %v364 = vpop.permute.xlu0 %363
        %365 = vrot.lane.b32.xlu0 %v335, 113
        %v366 = vpop.permute.xlu0 %365
        %vm367 = vcmask 924672
        %v368 = vsel %vm367, %v364, %v366
        %v372 = vmul.f32 %v344, %v364
        %v373 = vmul.f32 %v345, %v368
        %v374 = vmul.f32 %v346, %v366
        %375 = vrot.lane.b32.xlu0 %v328, 127
        %v376 = vpop.permute.xlu0 %375
        %377 = vrot.lane.b32.xlu0 %v329, 127
        %v378 = vpop.permute.xlu0 %377
        %vm379 = vcmask 1039360
        %v380 = vsel %vm379, %v376, %v378
        %v384 = vmul.f32 %v344, %v376
        %v385 = vmul.f32 %v345, %v380
        %v386 = vmul.f32 %v346, %v378
        %v387 = vld [vmem:[#allocation2 + $0x8] sm:$0xff]
        %v388 = vld [vmem:[#allocation2 + $0x10] sm:$0xff]
        %v389 = vld [vmem:[#allocation2 + $0x18] sm:$0xff]
        %390 = vrot.lane.b32.xlu0 %v334, 1
        %v391 = vpop.permute.xlu0 %390
        %392 = vrot.lane.b32.xlu0 %v335, 1
        %v393 = vpop.permute.xlu0 %392
        %vm394 = vcmask 7168
        %v395 = vsel %vm394, %v391, %v393
        %v399 = vmul.f32 %v387, %v391
        %v400 = vmul.f32 %v388, %v395
        %v401 = vmul.f32 %v389, %v393
        %402 = vrot.lane.b32.xlu0 %v328, 15
        %v403 = vpop.permute.xlu0 %402
        %404 = vrot.lane.b32.xlu0 %v329, 15
        %v405 = vpop.permute.xlu0 %404
        %vm406 = vcmask 121856
        %v407 = vsel %vm406, %v403, %v405
        %v411 = vmul.f32 %v387, %v403
        %v412 = vmul.f32 %v388, %v407
        %v413 = vmul.f32 %v389, %v405
        %414 = vrot.lane.b32.xlu0 %v334, 17
        %v415 = vpop.permute.xlu0 %414
        %416 = vrot.lane.b32.xlu0 %v335, 17
        %v417 = vpop.permute.xlu0 %416
        %v418 = vsel %vm291, %v415, %v417
        %v422 = vmul.f32 %v387, %v415
        %v423 = vmul.f32 %v388, %v418
        %v424 = vmul.f32 %v389, %v417
        %428 = vrot.lane.b32.xlu0 %v344, 127
        %v429 = vpop.permute.xlu0 %428
        %430 = vrot.lane.b32.xlu0 %v345, 127
        %v431 = vpop.permute.xlu0 %430
        %432 = vrot.lane.b32.xlu0 %v346, 127
        %v433 = vpop.permute.xlu0 %432
        %v434 = vsel %vm379, %v429, %v431
        %v435 = vsel %vm379, %v431, %v433
        %442 = vrot.lane.b32.xlu0 %v372, 126
        %v443 = vpop.permute.xlu0 %442
        %444 = vrot.lane.b32.xlu0 %v373, 126
        %v445 = vpop.permute.xlu0 %444
        %446 = vrot.lane.b32.xlu0 %v374, 126
        %v447 = vpop.permute.xlu0 %446
        %vm448 = vcmask 1031168
        %v449 = vsel %vm448, %v443, %v445
        %v450 = vsel %vm448, %v445, %v447
        %457 = vrot.lane.b32.xlu0 %v384, 112
        %v458 = vpop.permute.xlu0 %457
        %459 = vrot.lane.b32.xlu0 %v385, 112
        %v460 = vpop.permute.xlu0 %459
        %461 = vrot.lane.b32.xlu0 %v386, 112
        %v462 = vpop.permute.xlu0 %461
        %vm463 = vcmask 916480
        %v464 = vsel %vm463, %v458, %v460
        %v465 = vsel %vm463, %v460, %v462
        %469 = vrot.lane.b32.xlu0 %v345, 111
        %v470 = vpop.permute.xlu0 %469
        %471 = vrot.lane.b32.xlu0 %v346, 111
        %v472 = vpop.permute.xlu0 %471
        %v473 = vsel %vm353, %v470, %v472
        %480 = vrot.lane.b32.xlu0 %v399, 110
        %v481 = vpop.permute.xlu0 %480
        %482 = vrot.lane.b32.xlu0 %v400, 110
        %v483 = vpop.permute.xlu0 %482
        %484 = vrot.lane.b32.xlu0 %v401, 110
        %v485 = vpop.permute.xlu0 %484
        %vm486 = vcmask 900096
        %v487 = vsel %vm486, %v481, %v483
        %v488 = vsel %vm486, %v483, %v485
        %495 = vrot.lane.b32.xlu0 %v411, 96
        %v496 = vpop.permute.xlu0 %495
        %497 = vrot.lane.b32.xlu0 %v412, 96
        %v498 = vpop.permute.xlu0 %497
        %499 = vrot.lane.b32.xlu0 %v413, 96
        %v500 = vpop.permute.xlu0 %499
        %vm501 = vcmask 785408
        %v502 = vsel %vm501, %v496, %v498
        %v503 = vsel %vm501, %v498, %v500
        %510 = vrot.lane.b32.xlu0 %v387, 95
        %v511 = vpop.permute.xlu0 %510
        %512 = vrot.lane.b32.xlu0 %v388, 95
        %v513 = vpop.permute.xlu0 %512
        %514 = vrot.lane.b32.xlu0 %v389, 95
        %v515 = vpop.permute.xlu0 %514
        %vm516 = vcmask 777216
        %v517 = vsel %vm516, %v511, %v513
        %v518 = vsel %vm516, %v513, %v515
        %525 = vrot.lane.b32.xlu0 %v422, 94
        %v526 = vpop.permute.xlu0 %525
        %527 = vrot.lane.b32.xlu0 %v423, 94
        %v528 = vpop.permute.xlu0 %527
        %529 = vrot.lane.b32.xlu0 %v424, 94
        %v530 = vpop.permute.xlu0 %529
        %vm531 = vcmask 769024
        %v532 = vsel %vm531, %v526, %v528
        %v533 = vsel %vm531, %v528, %v530
        %v537 = vpack.c.bf16 %v434, %v358
        %v538 = vpack.c.bf16 %v435, %v359
        %v539 = vpack.c.bf16 %v433, %v360
        %v540 = vpack.c.bf16 %v464, %v449
        %v541 = vpack.c.bf16 %v465, %v450
        %v542 = vpack.c.bf16 %v462, %v447
        %v543 = vpack.c.bf16 %v481, %v470
        %v544 = vpack.c.bf16 %v487, %v473
        %v545 = vpack.c.bf16 %v488, %v472
        %v546 = vpack.c.bf16 %v511, %v496
        %v547 = vpack.c.bf16 %v517, %v502
        %v548 = vpack.c.bf16 %v518, %v503
        %v549 = vpack.c.bf16 %v526, %v526
        %v550 = vpack.c.bf16 %v532, %v532
        %v551 = vpack.c.bf16 %v533, %v533
        %v552 = vld [vmem:[%s1] sm:$0xf]
        %v553 = vld [vmem:[%s1 + $0x4] sm:$0xf]
        %555 = vset.pattern.permute.xlu0 0
        %556 = vperm.xlu0 %555, %v338
        %v557 = vpop.permute.xlu0 %556
        %560 = vset.pattern.permute.xlu0 0
        %561 = vperm.xlu0 %560, %v339
        %v562 = vpop.permute.xlu0 %561
        %v566 = vunpack.c.l.b16 %v552
        %v567 = vunpack.c.l.b16 %v553
        %v568 = vpack.c.b16 %v567, %v566
        %584 = vrot.lane.b32.xlu0 %v537, 17
        %v585 = vpop.permute.xlu0 %584
        %586 = vrot.lane.b32.xlu0 %v538, 17
        %v587 = vpop.permute.xlu0 %586
        %588 = vrot.lane.b32.xlu0 %v539, 17
        %v589 = vpop.permute.xlu0 %588
        %590 = vrot.lane.b32.xlu0 %v540, 17
        %v591 = vpop.permute.xlu0 %590
        %592 = vrot.lane.b32.xlu0 %v541, 17
        %v593 = vpop.permute.xlu0 %592
        %594 = vrot.lane.b32.xlu0 %v542, 17
        %v595 = vpop.permute.xlu0 %594
        %596 = vrot.lane.b32.xlu0 %v543, 17
        %v597 = vpop.permute.xlu0 %596
        %598 = vrot.lane.b32.xlu0 %v544, 17
        %v599 = vpop.permute.xlu0 %598
        %600 = vrot.lane.b32.xlu0 %v545, 17
        %v601 = vpop.permute.xlu0 %600
        %602 = vrot.lane.b32.xlu0 %v546, 17
        %v603 = vpop.permute.xlu0 %602
        %604 = vrot.lane.b32.xlu0 %v547, 17
        %v605 = vpop.permute.xlu0 %604
        %606 = vrot.lane.b32.xlu0 %v548, 17
        %v607 = vpop.permute.xlu0 %606
        %608 = vrot.lane.b32.xlu0 %v549, 17
        %v609 = vpop.permute.xlu0 %608
        %610 = vrot.lane.b32.xlu0 %v550, 17
        %v611 = vpop.permute.xlu0 %610
        %612 = vrot.lane.b32.xlu0 %v551, 17
        %v613 = vpop.permute.xlu0 %612
        %vm614 = vcmask 138240
        %v615 = vsel %vm614, %v585, %v587
        %v616 = vsel %vm614, %v587, %v589
        %v617 = vsel %vm614, %v591, %v593
        %v618 = vsel %vm614, %v593, %v595
        %v619 = vsel %vm614, %v597, %v599
        %v620 = vsel %vm614, %v599, %v601
        %v621 = vsel %vm614, %v603, %v605
        %v622 = vsel %vm614, %v605, %v607
        %v623 = vsel %vm614, %v609, %v611
        %v624 = vsel %vm614, %v611, %v613
        %vm633 = vcmask 588800
        %v635 = vsel %vm633, %v568, 0
        %vm637 = vcmask 1043456
        %v639 = vsel %vm637, %v623, 0
        %v642 = vsel %vm637, %v624, 0
        %644 = vmatpush.bf16.msra.mxu0 0
        %645 = vmatpush.bf16.msra.mxu0 0
        %646 = vmatpush.bf16.msra.mxu0 0
        %647 = vmatpush.bf16.msra.mxu0 %v639
        %648 = vmatpush.bf16.msra.mxu0 %v621
        %649 = vmatpush.bf16.msra.mxu0 %v619
        %650 = vmatpush.bf16.msra.mxu0 %v617
        %651 = vmatpush.bf16.msra.mxu0 %v615
        %652 = vmatmul.bf16.gmra.mxu0 %v635
        %v653 = vpop.f32.mrf.mxu0
        %v654 = vadd.f32 %v557, %v653
        %v655 = vpop.f32.mrf.mxu0
        %v656 = vadd.f32 %v562, %v655
        %657 = vdwg.mxu0
        %658 = vmatpush.bf16.msra.mxu0 0
        %659 = vmatpush.bf16.msra.mxu0 0
        %660 = vmatpush.bf16.msra.mxu0 0
        %661 = vmatpush.bf16.msra.mxu0 %v642
        %662 = vmatpush.bf16.msra.mxu0 %v622
        %663 = vmatpush.bf16.msra.mxu0 %v620
        %664 = vmatpush.bf16.msra.mxu0 %v618
        %665 = vmatpush.bf16.msra.mxu0 %v616
        %666 = vmatmul.bf16.gmra.mxu0 %v635
        %v667 = vpop.f32.mrf.mxu0
        %v668 = vadd.f32 %v557, %v667
        %v669 = vpop.f32.mrf.mxu0
        %v670 = vadd.f32 %v562, %v669
        %671 = vdwg.mxu0
        %vm672 = vcmask 130048
        %v674 = vsel %vm672, %v336, 0
        %v677 = vsel %vm672, %v337, 0
        %679 = vmatpush.msra.mxu0 0.0
        %680 = vmatpush.msra.mxu0 0.0
        %681 = vmatpush.msra.mxu0 0.0
        %682 = vmatpush.msra.mxu0 0.0
        %683 = vmatpush.msra.mxu0 0.0
        %684 = vmatpush.msra.mxu0 0.0
        %685 = vmatpush.msra.mxu0 0.0
        %686 = vmatpush.msra.mxu0 0.0
        %687 = vmatpush.msra.mxu0 0.0
        %688 = vmatpush.msra.mxu0 0.0
        %689 = vmatpush.msra.mxu0 0.0
        %690 = vmatpush.msra.mxu0 0.0
        %691 = vmatpush.msra.mxu0 0.0
        %692 = vmatpush.msra.mxu0 0.0
        %693 = vmatpush.msra.mxu0 %v656
        %694 = vmatpush.msra.mxu0 %v654
        %695 = vmatmul.f32.gmra.mxu0 %v674
        %v696 = vpop.f32.mrf.mxu0
        %v697 = vadd.f32 0.0, %v696
        %698 = vmatmul.f32.gmra.mxu0 %v677
        %v699 = vpop.f32.mrf.mxu0
        %v700 = vadd.f32 0.0, %v699
        %701 = vdwg.mxu0
        %702 = vmatpush.msra.mxu0 0.0
        %703 = vmatpush.msra.mxu0 0.0
        %704 = vmatpush.msra.mxu0 0.0
        %705 = vmatpush.msra.mxu0 0.0
        %706 = vmatpush.msra.mxu0 0.0
        %707 = vmatpush.msra.mxu0 0.0
        %708 = vmatpush.msra.mxu0 0.0
        %709 = vmatpush.msra.mxu0 0.0
        %710 = vmatpush.msra.mxu0 0.0
        %711 = vmatpush.msra.mxu0 0.0
        %712 = vmatpush.msra.mxu0 0.0
        %713 = vmatpush.msra.mxu0 0.0
        %714 = vmatpush.msra.mxu0 0.0
        %715 = vmatpush.msra.mxu0 0.0
        %716 = vmatpush.msra.mxu0 %v670
        %717 = vmatpush.msra.mxu0 %v668
        %718 = vmatmul.f32.gmra.mxu0 %v674
        %v719 = vpop.f32.mrf.mxu0
        %v720 = vadd.f32 0.0, %v719
        %721 = vmatmul.f32.gmra.mxu0 %v677
        %v722 = vpop.f32.mrf.mxu0
        %v723 = vadd.f32 0.0, %v722
        %724 = vdwg.mxu0
        %v725 = vadd.f32 %v697, %v720
        %726 = vadd.xlane.f32.xlu0 %v725
        %v727 = vpop.xlane.xlu0 %726
        %v728 = vadd.f32 %v700, %v723
        %729 = vadd.xlane.f32.xlu0 %v728
        %v730 = vpop.xlane.xlu0 %729
        %v731 = vmul.f32 %v727, 0.00390625
        %v732 = vmul.f32 %v730, 0.00390625
        %v733 = vsub.f32 %v654, %v731
        %v734 = vsub.f32 %v668, %v731
        %v735 = vsub.f32 %v656, %v732
        %v736 = vsub.f32 %v670, %v732
        %v737 = vmul.f32 %v733, %v733
        %v738 = vmul.f32 %v734, %v734
        %v739 = vmul.f32 %v735, %v735
        %v740 = vmul.f32 %v736, %v736
        %741 = vmatpush.msra.mxu0 0.0
        %742 = vmatpush.msra.mxu0 0.0
        %743 = vmatpush.msra.mxu0 0.0
        %744 = vmatpush.msra.mxu0 0.0
        %745 = vmatpush.msra.mxu0 0.0
        %746 = vmatpush.msra.mxu0 0.0
        %747 = vmatpush.msra.mxu0 0.0
        %748 = vmatpush.msra.mxu0 0.0
        %749 = vmatpush.msra.mxu0 0.0
        %750 = vmatpush.msra.mxu0 0.0
        %751 = vmatpush.msra.mxu0 0.0
        %752 = vmatpush.msra.mxu0 0.0
        %753 = vmatpush.msra.mxu0 0.0
        %754 = vmatpush.msra.mxu0 0.0
        %755 = vmatpush.msra.mxu0 %v739
        %756 = vmatpush.msra.mxu0 %v737
        %757 = vmatmul.f32.gmra.mxu0 %v674
        %v758 = vpop.f32.mrf.mxu0
        %v759 = vadd.f32 0.0, %v758
        %760 = vmatmul.f32.gmra.mxu0 %v677
        %v761 = vpop.f32.mrf.mxu0
        %v762 = vadd.f32 0.0, %v761
        %763 = vdwg.mxu0
        %764 = vmatpush.msra.mxu0 0.0
        %765 = vmatpush.msra.mxu0 0.0
        %766 = vmatpush.msra.mxu0 0.0
        %767 = vmatpush.msra.mxu0 0.0
        %768 = vmatpush.msra.mxu0 0.0
        %769 = vmatpush.msra.mxu0 0.0
        %770 = vmatpush.msra.mxu0 0.0
        %771 = vmatpush.msra.mxu0 0.0
        %772 = vmatpush.msra.mxu0 0.0
        %773 = vmatpush.msra.mxu0 0.0
        %774 = vmatpush.msra.mxu0 0.0
        %775 = vmatpush.msra.mxu0 0.0
        %776 = vmatpush.msra.mxu0 0.0
        %777 = vmatpush.msra.mxu0 0.0
        %778 = vmatpush.msra.mxu0 %v740
        %779 = vmatpush.msra.mxu0 %v738
        %780 = vmatmul.f32.gmra.mxu0 %v674
        %v781 = vpop.f32.mrf.mxu0
        %v782 = vadd.f32 0.0, %v781
        %783 = vmatmul.f32.gmra.mxu0 %v677
        %v784 = vpop.f32.mrf.mxu0
        %v785 = vadd.f32 0.0, %v784
        %786 = vdwg.mxu0
        %v787 = vadd.f32 %v759, %v782
        %788 = vadd.xlane.f32.xlu0 %v787
        %v789 = vpop.xlane.xlu0 %788
        %v790 = vadd.f32 %v762, %v785
        %791 = vadd.xlane.f32.xlu0 %v790
        %v792 = vpop.xlane.xlu0 %791
        %v793 = vmul.f32 %v789, 0.00390625
        %v794 = vmul.f32 %v792, 0.00390625
        %v795 = vadd.f32 %v793, 1e-05
        %v796 = vadd.f32 %v794, 1e-05
        %v797 = vrsqrt.pop %v795
        %v798 = vmul.f32 %v797, %v795
        %v799 = vmul.f32 %v798, %v797
        %v800 = vmul.f32 0.5, %v799
        %v801 = vsub.f32 1.5, %v800
        %v802 = vmul.f32 %v797, %v801
        %vm803 = vweird.f32 %v795
        %vm804 = vweird.f32 %v797
        %vm805 = vmor %vm803, %vm804
        %v806 = vsel %vm805, %v797, %v802
        %v807 = vrsqrt.pop %v796
        %v808 = vmul.f32 %v807, %v796
        %v809 = vmul.f32 %v808, %v807
        %v810 = vmul.f32 0.5, %v809
        %v811 = vsub.f32 1.5, %v810
        %v812 = vmul.f32 %v807, %v811
        %vm813 = vweird.f32 %v796
        %vm814 = vweird.f32 %v807
        %vm815 = vmor %vm813, %vm814
        %v816 = vsel %vm815, %v807, %v812
        %v817 = vmul.f32 %v733, %v806
        %v818 = vmul.f32 %v734, %v806
        %v819 = vmul.f32 %v735, %v816
        %v820 = vmul.f32 %v736, %v816
        %821 = vset.pattern.permute.xlu0 1
        %822 = vperm.xlu0 %821, %v338
        %v823 = vpop.permute.xlu0 %822
        %825 = vset.pattern.permute.xlu0 1
        %826 = vperm.xlu0 %825, %v339
        %v827 = vpop.permute.xlu0 %826
        %v829 = vmul.f32 %v817, %v823
        %v830 = vmul.f32 %v818, %v823
        %v831 = vmul.f32 %v819, %v827
        %v832 = vmul.f32 %v820, %v827
        %833 = vset.pattern.permute.xlu0 2
        %834 = vperm.xlu0 %833, %v338
        %v835 = vpop.permute.xlu0 %834
        %837 = vset.pattern.permute.xlu0 2
        %838 = vperm.xlu0 %837, %v339
        %v839 = vpop.permute.xlu0 %838
        %v841 = vadd.f32 %v829, %v835
        %v842 = vadd.f32 %v830, %v835
        %v843 = vadd.f32 %v831, %v839
        %v844 = vadd.f32 %v832, %v839
        %v845 = vxor.u32 %v841, 2147483648
        %v846 = vxor.u32 %v842, 2147483648
        %v847 = vxor.u32 %v843, 2147483648
        %v848 = vxor.u32 %v844, 2147483648
        %v849 = vmul.f32 %v845, 1.442695
        %v850 = vpow.pop %v849
        %v851 = vmul.f32 %v846, 1.442695
        %v852 = vpow.pop %v851
        %v853 = vmul.f32 %v847, 1.442695
        %v854 = vpow.pop %v853
        %v855 = vmul.f32 %v848, 1.442695
        %v856 = vpow.pop %v855
        %v857 = vadd.f32 %v850, 1.0
        %v858 = vadd.f32 %v852, 1.0
        %v859 = vadd.f32 %v854, 1.0
        %v860 = vadd.f32 %v856, 1.0
        %v861 = vrcp.pop %v857
        %v862 = vmul.f32 %v857, %v861
        %v863 = vsub.f32 1.0, %v862
        %v864 = vmul.f32 %v861, %v863
        %v865 = vadd.f32 %v861, %v864
        %vm866 = vweird.f32 %v857
        %vm867 = vweird.f32 %v861
        %vm868 = vmor %vm866, %vm867
        %v869 = vsel %vm868, %v861, %v865
        %v870 = vand.u32 2147483647, %v857
        %vm871 = vcmp.eq.f32.partialorder %v870, 8.507059e+37
        %v872 = vand.u32 %v857, 2147483648
        %v873 = vor.u32 1.1754944e-38, %v872
        %v874 = vsel %vm871, %v873, %v869
        %v875 = vmul.f32 1.0, %v874
        %v876 = vrcp.pop %v858
        %v877 = vmul.f32 %v858, %v876
        %v878 = vsub.f32 1.0, %v877
        %v879 = vmul.f32 %v876, %v878
        %v880 = vadd.f32 %v876, %v879
        %vm881 = vweird.f32 %v858
        %vm882 = vweird.f32 %v876
        %vm883 = vmor %vm881, %vm882
        %v884 = vsel %vm883, %v876, %v880
        %v885 = vand.u32 2147483647, %v858
        %vm886 = vcmp.eq.f32.partialorder %v885, 8.507059e+37
        %v887 = vand.u32 %v858, 2147483648
        %v888 = vor.u32 1.1754944e-38, %v887
        %v889 = vsel %vm886, %v888, %v884
        %v890 = vmul.f32 1.0, %v889
        %v891 = vrcp.pop %v859
        %v892 = vmul.f32 %v859, %v891
        %v893 = vsub.f32 1.0, %v892
        %v894 = vmul.f32 %v891, %v893
        %v895 = vadd.f32 %v891, %v894
        %vm896 = vweird.f32 %v859
        %vm897 = vweird.f32 %v891
        %vm898 = vmor %vm896, %vm897
        %v899 = vsel %vm898, %v891, %v895
        %v900 = vand.u32 2147483647, %v859
        %vm901 = vcmp.eq.f32.partialorder %v900, 8.507059e+37
        %v902 = vand.u32 %v859, 2147483648
        %v903 = vor.u32 1.1754944e-38, %v902
        %v904 = vsel %vm901, %v903, %v899
        %v905 = vmul.f32 1.0, %v904
        %v906 = vrcp.pop %v860
        %v907 = vmul.f32 %v860, %v906
        %v908 = vsub.f32 1.0, %v907
        %v909 = vmul.f32 %v906, %v908
        %v910 = vadd.f32 %v906, %v909
        %vm911 = vweird.f32 %v860
        %vm912 = vweird.f32 %v906
        %vm913 = vmor %vm911, %vm912
        %v914 = vsel %vm913, %v906, %v910
        %v915 = vand.u32 2147483647, %v860
        %vm916 = vcmp.eq.f32.partialorder %v915, 8.507059e+37
        %v917 = vand.u32 %v860, 2147483648
        %v918 = vor.u32 1.1754944e-38, %v917
        %v919 = vsel %vm916, %v918, %v914
        %v920 = vmul.f32 1.0, %v919
        %v921 = vmul.f32 %v841, %v875
        %v922 = vmul.f32 %v842, %v890
        %v923 = vmul.f32 %v843, %v905
        %v924 = vmul.f32 %v844, %v920
        %925 = vst [vmem:[#allocation3 + $0x8] sm:$0xff] %v921
        %926 = vst [vmem:[#allocation3 + $0x10] sm:$0xff] %v922
        %927 = vst [vmem:[#allocation3 + $0x28] sm:$0xff] %v923
        %928 = vst [vmem:[#allocation3 + $0x30] sm:$0xff] %v924
        %v929 = vld [vmem:[#allocation3] sm:$0xff]
        %v930 = vld [vmem:[#allocation3 + $0x8] sm:$0xff]
        %v931 = vld [vmem:[#allocation3 + $0x10] sm:$0xff]
        %v932 = vld [vmem:[#allocation3 + $0x20] sm:$0xff]
        %v933 = vld [vmem:[#allocation3 + $0x28] sm:$0xff]
        %v934 = vld [vmem:[#allocation3 + $0x30] sm:$0xff]
        %v935 = vmul.f32 %v929, %v350
        %v936 = vmul.f32 %v930, %v354
        %v937 = vmul.f32 %v931, %v352
        %v938 = vmul.f32 %v932, %v350
        %v939 = vmul.f32 %v933, %v354
        %v940 = vmul.f32 %v934, %v352
        %v941 = vmul.f32 %v929, %v364
        %v942 = vmul.f32 %v930, %v368
        %v943 = vmul.f32 %v931, %v366
        %v944 = vmul.f32 %v932, %v364
        %v945 = vmul.f32 %v933, %v368
        %v946 = vmul.f32 %v934, %v366
        %v947 = vmul.f32 %v929, %v376
        %v948 = vmul.f32 %v930, %v380
        %v949 = vmul.f32 %v931, %v378
        %v950 = vmul.f32 %v932, %v376
        %v951 = vmul.f32 %v933, %v380
        %v952 = vmul.f32 %v934, %v378
        %v953 = vld [vmem:[#allocation3 + $0x8] sm:$0xff]
        %v954 = vld [vmem:[#allocation3 + $0x10] sm:$0xff]
        %v955 = vld [vmem:[#allocation3 + $0x18] sm:$0xff]
        %v956 = vld [vmem:[#allocation3 + $0x28] sm:$0xff]
        %v957 = vld [vmem:[#allocation3 + $0x30] sm:$0xff]
        %v958 = vld [vmem:[#allocation3 + $0x38] sm:$0xff]
        %v959 = vmul.f32 %v953, %v391
        %v960 = vmul.f32 %v954, %v395
        %v961 = vmul.f32 %v955, %v393
        %v962 = vmul.f32 %v956, %v391
        %v963 = vmul.f32 %v957, %v395
        %v964 = vmul.f32 %v958, %v393
        %v965 = vmul.f32 %v953, %v403
        %v966 = vmul.f32 %v954, %v407
        %v967 = vmul.f32 %v955, %v405
        %v968 = vmul.f32 %v956, %v403
        %v969 = vmul.f32 %v957, %v407
        %v970 = vmul.f32 %v958, %v405
        %v971 = vmul.f32 %v953, %v415
        %v972 = vmul.f32 %v954, %v418
        %v973 = vmul.f32 %v955, %v417
        %v974 = vmul.f32 %v956, %v415
        %v975 = vmul.f32 %v957, %v418
        %v976 = vmul.f32 %v958, %v417
        %983 = vrot.lane.b32.xlu0 %v929, 127
        %v984 = vpop.permute.xlu0 %983
        %985 = vrot.lane.b32.xlu0 %v930, 127
        %v986 = vpop.permute.xlu0 %985
        %987 = vrot.lane.b32.xlu0 %v931, 127
        %v988 = vpop.permute.xlu0 %987
        %989 = vrot.lane.b32.xlu0 %v932, 127
        %v990 = vpop.permute.xlu0 %989
        %991 = vrot.lane.b32.xlu0 %v933, 127
        %v992 = vpop.permute.xlu0 %991
        %993 = vrot.lane.b32.xlu0 %v934, 127
        %v994 = vpop.permute.xlu0 %993
        %v995 = vsel %vm379, %v984, %v986
        %v996 = vsel %vm379, %v986, %v988
        %v997 = vsel %vm379, %v990, %v992
        %v998 = vsel %vm379, %v992, %v994
        %1011 = vrot.lane.b32.xlu0 %v941, 126
        %v1012 = vpop.permute.xlu0 %1011
        %1013 = vrot.lane.b32.xlu0 %v942, 126
        %v1014 = vpop.permute.xlu0 %1013
        %1015 = vrot.lane.b32.xlu0 %v943, 126
        %v1016 = vpop.permute.xlu0 %1015
        %1017 = vrot.lane.b32.xlu0 %v944, 126
        %v1018 = vpop.permute.xlu0 %1017
        %1019 = vrot.lane.b32.xlu0 %v945, 126
        %v1020 = vpop.permute.xlu0 %1019
        %1021 = vrot.lane.b32.xlu0 %v946, 126
        %v1022 = vpop.permute.xlu0 %1021
        %v1023 = vsel %vm448, %v1012, %v1014
        %v1024 = vsel %vm448, %v1014, %v1016
        %v1025 = vsel %vm448, %v1018, %v1020
        %v1026 = vsel %vm448, %v1020, %v1022
        %1039 = vrot.lane.b32.xlu0 %v947, 112
        %v1040 = vpop.permute.xlu0 %1039
        %1041 = vrot.lane.b32.xlu0 %v948, 112
        %v1042 = vpop.permute.xlu0 %1041
        %1043 = vrot.lane.b32.xlu0 %v949, 112
        %v1044 = vpop.permute.xlu0 %1043
        %1045 = vrot.lane.b32.xlu0 %v950, 112
        %v1046 = vpop.permute.xlu0 %1045
        %1047 = vrot.lane.b32.xlu0 %v951, 112
        %v1048 = vpop.permute.xlu0 %1047
        %1049 = vrot.lane.b32.xlu0 %v952, 112
        %v1050 = vpop.permute.xlu0 %1049
        %v1051 = vsel %vm463, %v1040, %v1042
        %v1052 = vsel %vm463, %v1042, %v1044
        %v1053 = vsel %vm463, %v1046, %v1048
        %v1054 = vsel %vm463, %v1048, %v1050
        %1061 = vrot.lane.b32.xlu0 %v930, 111
        %v1062 = vpop.permute.xlu0 %1061
        %1063 = vrot.lane.b32.xlu0 %v931, 111
        %v1064 = vpop.permute.xlu0 %1063
        %1065 = vrot.lane.b32.xlu0 %v933, 111
        %v1066 = vpop.permute.xlu0 %1065
        %1067 = vrot.lane.b32.xlu0 %v934, 111
        %v1068 = vpop.permute.xlu0 %1067
        %v1069 = vsel %vm353, %v1062, %v1064
        %v1070 = vsel %vm353, %v1066, %v1068
        %1083 = vrot.lane.b32.xlu0 %v959, 110
        %v1084 = vpop.permute.xlu0 %1083
        %1085 = vrot.lane.b32.xlu0 %v960, 110
        %v1086 = vpop.permute.xlu0 %1085
        %1087 = vrot.lane.b32.xlu0 %v961, 110
        %v1088 = vpop.permute.xlu0 %1087
        %1089 = vrot.lane.b32.xlu0 %v962, 110
        %v1090 = vpop.permute.xlu0 %1089
        %1091 = vrot.lane.b32.xlu0 %v963, 110
        %v1092 = vpop.permute.xlu0 %1091
        %1093 = vrot.lane.b32.xlu0 %v964, 110
        %v1094 = vpop.permute.xlu0 %1093
        %v1095 = vsel %vm486, %v1084, %v1086
        %v1096 = vsel %vm486, %v1086, %v1088
        %v1097 = vsel %vm486, %v1090, %v1092
        %v1098 = vsel %vm486, %v1092, %v1094
        %1111 = vrot.lane.b32.xlu0 %v965, 96
        %v1112 = vpop.permute.xlu0 %1111
        %1113 = vrot.lane.b32.xlu0 %v966, 96
        %v1114 = vpop.permute.xlu0 %1113
        %1115 = vrot.lane.b32.xlu0 %v967, 96
        %v1116 = vpop.permute.xlu0 %1115
        %1117 = vrot.lane.b32.xlu0 %v968, 96
        %v1118 = vpop.permute.xlu0 %1117
        %1119 = vrot.lane.b32.xlu0 %v969, 96
        %v1120 = vpop.permute.xlu0 %1119
        %1121 = vrot.lane.b32.xlu0 %v970, 96
        %v1122 = vpop.permute.xlu0 %1121
        %v1123 = vsel %vm501, %v1112, %v1114
        %v1124 = vsel %vm501, %v1114, %v1116
        %v1125 = vsel %vm501, %v1118, %v1120
        %v1126 = vsel %vm501, %v1120, %v1122
        %1139 = vrot.lane.b32.xlu0 %v953, 95
        %v1140 = vpop.permute.xlu0 %1139
        %1141 = vrot.lane.b32.xlu0 %v954, 95
        %v1142 = vpop.permute.xlu0 %1141
        %1143 = vrot.lane.b32.xlu0 %v955, 95
        %v1144 = vpop.permute.xlu0 %1143
        %1145 = vrot.lane.b32.xlu0 %v956, 95
        %v1146 = vpop.permute.xlu0 %1145
        %1147 = vrot.lane.b32.xlu0 %v957, 95
        %v1148 = vpop.permute.xlu0 %1147
        %1149 = vrot.lane.b32.xlu0 %v958, 95
        %v1150 = vpop.permute.xlu0 %1149
        %v1151 = vsel %vm516, %v1140, %v1142
        %v1152 = vsel %vm516, %v1142, %v1144
        %v1153 = vsel %vm516, %v1146, %v1148
        %v1154 = vsel %vm516, %v1148, %v1150
        %1167 = vrot.lane.b32.xlu0 %v971, 94
        %v1168 = vpop.permute.xlu0 %1167
        %1169 = vrot.lane.b32.xlu0 %v972, 94
        %v1170 = vpop.permute.xlu0 %1169
        %1171 = vrot.lane.b32.xlu0 %v973, 94
        %v1172 = vpop.permute.xlu0 %1171
        %1173 = vrot.lane.b32.xlu0 %v974, 94
        %v1174 = vpop.permute.xlu0 %1173
        %1175 = vrot.lane.b32.xlu0 %v975, 94
        %v1176 = vpop.permute.xlu0 %1175
        %1177 = vrot.lane.b32.xlu0 %v976, 94
        %v1178 = vpop.permute.xlu0 %1177
        %v1179 = vsel %vm531, %v1168, %v1170
        %v1180 = vsel %vm531, %v1170, %v1172
        %v1181 = vsel %vm531, %v1174, %v1176
        %v1182 = vsel %vm531, %v1176, %v1178
        %v1189 = vpack.c.bf16 %v938, %v935
        %v1190 = vpack.c.bf16 %v939, %v936
        %v1191 = vpack.c.bf16 %v940, %v937
        %v1192 = vpack.c.bf16 %v997, %v995
        %v1193 = vpack.c.bf16 %v998, %v996
        %v1194 = vpack.c.bf16 %v994, %v988
        %v1195 = vpack.c.bf16 %v1025, %v1023
        %v1196 = vpack.c.bf16 %v1026, %v1024
        %v1197 = vpack.c.bf16 %v1022, %v1016
        %v1198 = vpack.c.bf16 %v1053, %v1051
        %v1199 = vpack.c.bf16 %v1054, %v1052
        %v1200 = vpack.c.bf16 %v1050, %v1044
        %v1201 = vpack.c.bf16 %v1066, %v1062
        %v1202 = vpack.c.bf16 %v1070, %v1069
        %v1203 = vpack.c.bf16 %v1068, %v1064
        %v1204 = vpack.c.bf16 %v1090, %v1084
        %v1205 = vpack.c.bf16 %v1097, %v1095
        %v1206 = vpack.c.bf16 %v1098, %v1096
        %v1207 = vpack.c.bf16 %v1118, %v1112
        %v1208 = vpack.c.bf16 %v1125, %v1123
        %v1209 = vpack.c.bf16 %v1126, %v1124
        %v1210 = vpack.c.bf16 %v1146, %v1140
        %v1211 = vpack.c.bf16 %v1153, %v1151
        %v1212 = vpack.c.bf16 %v1154, %v1152
        %v1213 = vpack.c.bf16 %v1174, %v1168
        %v1214 = vpack.c.bf16 %v1181, %v1179
        %v1215 = vpack.c.bf16 %v1182, %v1180
        %v1216 = vld [vmem:[%s2] sm:$0xff]
        %v1217 = vld [vmem:[%s2 + $0x8] sm:$0xff]
        %1218 = vset.pattern.permute.xlu0 3
        %1219 = vperm.xlu0 %1218, %v338
        %v1220 = vpop.permute.xlu0 %1219
        %1222 = vset.pattern.permute.xlu0 3
        %1223 = vperm.xlu0 %1222, %v339
        %v1224 = vpop.permute.xlu0 %1223
        %v1228 = vunpack.c.l.b16 %v1216
        %v1229 = vunpack.c.h.b16 %v1216
        %v1230 = vunpack.c.l.b16 %v1217
        %v1231 = vunpack.c.h.b16 %v1217
        %v1232 = vpack.c.b16 %v1230, %v1228
        %v1233 = vpack.c.b16 %v1231, %v1229
        %1262 = vrot.lane.b32.xlu0 %v1189, 17
        %v1263 = vpop.permute.xlu0 %1262
        %1264 = vrot.lane.b32.xlu0 %v1190, 17
        %v1265 = vpop.permute.xlu0 %1264
        %1266 = vrot.lane.b32.xlu0 %v1191, 17
        %v1267 = vpop.permute.xlu0 %1266
        %1268 = vrot.lane.b32.xlu0 %v1192, 17
        %v1269 = vpop.permute.xlu0 %1268
        %1270 = vrot.lane.b32.xlu0 %v1193, 17
        %v1271 = vpop.permute.xlu0 %1270
        %1272 = vrot.lane.b32.xlu0 %v1194, 17
        %v1273 = vpop.permute.xlu0 %1272
        %1274 = vrot.lane.b32.xlu0 %v1195, 17
        %v1275 = vpop.permute.xlu0 %1274
        %1276 = vrot.lane.b32.xlu0 %v1196, 17
        %v1277 = vpop.permute.xlu0 %1276
        %1278 = vrot.lane.b32.xlu0 %v1197, 17
        %v1279 = vpop.permute.xlu0 %1278
        %1280 = vrot.lane.b32.xlu0 %v1198, 17
        %v1281 = vpop.permute.xlu0 %1280
        %1282 = vrot.lane.b32.xlu0 %v1199, 17
        %v1283 = vpop.permute.xlu0 %1282
        %1284 = vrot.lane.b32.xlu0 %v1200, 17
        %v1285 = vpop.permute.xlu0 %1284
        %1286 = vrot.lane.b32.xlu0 %v1201, 17
        %v1287 = vpop.permute.xlu0 %1286
        %1288 = vrot.lane.b32.xlu0 %v1202, 17
        %v1289 = vpop.permute.xlu0 %1288
        %1290 = vrot.lane.b32.xlu0 %v1203, 17
        %v1291 = vpop.permute.xlu0 %1290
        %1292 = vrot.lane.b32.xlu0 %v1204, 17
        %v1293 = vpop.permute.xlu0 %1292
        %1294 = vrot.lane.b32.xlu0 %v1205, 17
        %v1295 = vpop.permute.xlu0 %1294
        %1296 = vrot.lane.b32.xlu0 %v1206, 17
        %v1297 = vpop.permute.xlu0 %1296
        %1298 = vrot.lane.b32.xlu0 %v1207, 17
        %v1299 = vpop.permute.xlu0 %1298
        %1300 = vrot.lane.b32.xlu0 %v1208, 17
        %v1301 = vpop.permute.xlu0 %1300
        %1302 = vrot.lane.b32.xlu0 %v1209, 17
        %v1303 = vpop.permute.xlu0 %1302
        %1304 = vrot.lane.b32.xlu0 %v1210, 17
        %v1305 = vpop.permute.xlu0 %1304
        %1306 = vrot.lane.b32.xlu0 %v1211, 17
        %v1307 = vpop.permute.xlu0 %1306
        %1308 = vrot.lane.b32.xlu0 %v1212, 17
        %v1309 = vpop.permute.xlu0 %1308
        %1310 = vrot.lane.b32.xlu0 %v1213, 17
        %v1311 = vpop.permute.xlu0 %1310
        %1312 = vrot.lane.b32.xlu0 %v1214, 17
        %v1313 = vpop.permute.xlu0 %1312
        %1314 = vrot.lane.b32.xlu0 %v1215, 17
        %v1315 = vpop.permute.xlu0 %1314
        %v1316 = vsel %vm614, %v1263, %v1265
        %v1317 = vsel %vm614, %v1265, %v1267
        %v1318 = vsel %vm614, %v1269, %v1271
        %v1319 = vsel %vm614, %v1271, %v1273
        %v1320 = vsel %vm614, %v1275, %v1277
        %v1321 = vsel %vm614, %v1277, %v1279
        %v1322 = vsel %vm614, %v1281, %v1283
        %v1323 = vsel %vm614, %v1283, %v1285
        %v1324 = vsel %vm614, %v1287, %v1289
        %v1325 = vsel %vm614, %v1289, %v1291
        %v1326 = vsel %vm614, %v1293, %v1295
        %v1327 = vsel %vm614, %v1295, %v1297
        %v1328 = vsel %vm614, %v1299, %v1301
        %v1329 = vsel %vm614, %v1301, %v1303
        %v1330 = vsel %vm614, %v1305, %v1307
        %v1331 = vsel %vm614, %v1307, %v1309
        %v1332 = vsel %vm614, %v1311, %v1313
        %v1333 = vsel %vm614, %v1313, %v1315
        %v1353 = vsel %vm672, %v1233, 0
        %1355 = vmatpush.bf16.msra.mxu0 %v1330
        %1356 = vmatpush.bf16.msra.mxu0 %v1328
        %1357 = vmatpush.bf16.msra.mxu0 %v1326
        %1358 = vmatpush.bf16.msra.mxu0 %v1324
        %1359 = vmatpush.bf16.msra.mxu0 %v1322
        %1360 = vmatpush.bf16.msra.mxu0 %v1320
        %1361 = vmatpush.bf16.msra.mxu0 %v1318
        %1362 = vmatpush.bf16.msra.mxu0 %v1316
        %1363 = vmatmul.bf16.gmra.mxu0 %v1232
        %v1364 = vpop.f32.mrf.mxu0
        %v1365 = vadd.f32 %v1220, %v1364
        %v1366 = vpop.f32.mrf.mxu0
        %v1367 = vadd.f32 %v1224, %v1366
        %1368 = vdwg.mxu0
        %1369 = vmatpush.bf16.msra.mxu0 0
        %1370 = vmatpush.bf16.msra.mxu0 0
        %1371 = vmatpush.bf16.msra.mxu0 0
        %1372 = vmatpush.bf16.msra.mxu0 0
        %1373 = vmatpush.bf16.msra.mxu0 0
        %1374 = vmatpush.bf16.msra.mxu0 0
        %1375 = vmatpush.bf16.msra.mxu0 0
        %1376 = vmatpush.bf16.msra.mxu0 %v1332
        %1377 = vmatmul.bf16.gmra.mxu0 %v1353
        %v1378 = vpop.f32.mrf.mxu0
        %v1379 = vadd.f32 %v1365, %v1378
        %v1380 = vpop.f32.mrf.mxu0
        %v1381 = vadd.f32 %v1367, %v1380
        %1382 = vdwg.mxu0
        %1383 = vmatpush.bf16.msra.mxu0 %v1331
        %1384 = vmatpush.bf16.msra.mxu0 %v1329
        %1385 = vmatpush.bf16.msra.mxu0 %v1327
        %1386 = vmatpush.bf16.msra.mxu0 %v1325
        %1387 = vmatpush.bf16.msra.mxu0 %v1323
        %1388 = vmatpush.bf16.msra.mxu0 %v1321
        %1389 = vmatpush.bf16.msra.mxu0 %v1319
        %1390 = vmatpush.bf16.msra.mxu0 %v1317
        %1391 = vmatmul.bf16.gmra.mxu0 %v1232
        %v1392 = vpop.f32.mrf.mxu0
        %v1393 = vadd.f32 %v1220, %v1392
        %v1394 = vpop.f32.mrf.mxu0
        %v1395 = vadd.f32 %v1224, %v1394
        %1396 = vdwg.mxu0
        %1397 = vmatpush.bf16.msra.mxu0 0
        %1398 = vmatpush.bf16.msra.mxu0 0
        %1399 = vmatpush.bf16.msra.mxu0 0
        %1400 = vmatpush.bf16.msra.mxu0 0
        %1401 = vmatpush.bf16.msra.mxu0 0
        %1402 = vmatpush.bf16.msra.mxu0 0
        %1403 = vmatpush.bf16.msra.mxu0 0
        %1404 = vmatpush.bf16.msra.mxu0 %v1333
        %1405 = vmatmul.bf16.gmra.mxu0 %v1353
        %v1406 = vpop.f32.mrf.mxu0
        %v1407 = vadd.f32 %v1393, %v1406
        %v1408 = vpop.f32.mrf.mxu0
        %v1409 = vadd.f32 %v1395, %v1408
        %1410 = vdwg.mxu0
        %1411 = vmatpush.msra.mxu0 0.0
        %1412 = vmatpush.msra.mxu0 0.0
        %1413 = vmatpush.msra.mxu0 0.0
        %1414 = vmatpush.msra.mxu0 0.0
        %1415 = vmatpush.msra.mxu0 0.0
        %1416 = vmatpush.msra.mxu0 0.0
        %1417 = vmatpush.msra.mxu0 0.0
        %1418 = vmatpush.msra.mxu0 0.0
        %1419 = vmatpush.msra.mxu0 0.0
        %1420 = vmatpush.msra.mxu0 0.0
        %1421 = vmatpush.msra.mxu0 0.0
        %1422 = vmatpush.msra.mxu0 0.0
        %1423 = vmatpush.msra.mxu0 0.0
        %1424 = vmatpush.msra.mxu0 0.0
        %1425 = vmatpush.msra.mxu0 %v1381
        %1426 = vmatpush.msra.mxu0 %v1379
        %1427 = vmatmul.f32.gmra.mxu0 %v674
        %v1428 = vpop.f32.mrf.mxu0
        %v1429 = vadd.f32 0.0, %v1428
        %1430 = vmatmul.f32.gmra.mxu0 %v677
        %v1431 = vpop.f32.mrf.mxu0
        %v1432 = vadd.f32 0.0, %v1431
        %1433 = vdwg.mxu0
        %1434 = vmatpush.msra.mxu0 0.0
        %1435 = vmatpush.msra.mxu0 0.0
        %1436 = vmatpush.msra.mxu0 0.0
        %1437 = vmatpush.msra.mxu0 0.0
        %1438 = vmatpush.msra.mxu0 0.0
        %1439 = vmatpush.msra.mxu0 0.0
        %1440 = vmatpush.msra.mxu0 0.0
        %1441 = vmatpush.msra.mxu0 0.0
        %1442 = vmatpush.msra.mxu0 0.0
        %1443 = vmatpush.msra.mxu0 0.0
        %1444 = vmatpush.msra.mxu0 0.0
        %1445 = vmatpush.msra.mxu0 0.0
        %1446 = vmatpush.msra.mxu0 0.0
        %1447 = vmatpush.msra.mxu0 0.0
        %1448 = vmatpush.msra.mxu0 %v1409
        %1449 = vmatpush.msra.mxu0 %v1407
        %1450 = vmatmul.f32.gmra.mxu0 %v674
        %v1451 = vpop.f32.mrf.mxu0
        %v1452 = vadd.f32 0.0, %v1451
        %1453 = vmatmul.f32.gmra.mxu0 %v677
        %v1454 = vpop.f32.mrf.mxu0
        %v1455 = vadd.f32 0.0, %v1454
        %1456 = vdwg.mxu0
        %v1457 = vadd.f32 %v1429, %v1452
        %1458 = vadd.xlane.f32.xlu0 %v1457
        %v1459 = vpop.xlane.xlu0 %1458
        %v1460 = vadd.f32 %v1432, %v1455
        %1461 = vadd.xlane.f32.xlu0 %v1460
        %v1462 = vpop.xlane.xlu0 %1461
        %v1463 = vmul.f32 %v1459, 0.00390625
        %v1464 = vmul.f32 %v1462, 0.00390625
        %v1465 = vsub.f32 %v1379, %v1463
        %v1466 = vsub.f32 %v1407, %v1463
        %v1467 = vsub.f32 %v1381, %v1464
        %v1468 = vsub.f32 %v1409, %v1464
        %v1469 = vmul.f32 %v1465, %v1465
        %v1470 = vmul.f32 %v1466, %v1466
        %v1471 = vmul.f32 %v1467, %v1467
        %v1472 = vmul.f32 %v1468, %v1468
        %1473 = vmatpush.msra.mxu0 0.0
        %1474 = vmatpush.msra.mxu0 0.0
        %1475 = vmatpush.msra.mxu0 0.0
        %1476 = vmatpush.msra.mxu0 0.0
        %1477 = vmatpush.msra.mxu0 0.0
        %1478 = vmatpush.msra.mxu0 0.0
        %1479 = vmatpush.msra.mxu0 0.0
        %1480 = vmatpush.msra.mxu0 0.0
        %1481 = vmatpush.msra.mxu0 0.0
        %1482 = vmatpush.msra.mxu0 0.0
        %1483 = vmatpush.msra.mxu0 0.0
        %1484 = vmatpush.msra.mxu0 0.0
        %1485 = vmatpush.msra.mxu0 0.0
        %1486 = vmatpush.msra.mxu0 0.0
        %1487 = vmatpush.msra.mxu0 %v1471
        %1488 = vmatpush.msra.mxu0 %v1469
        %1489 = vmatmul.f32.gmra.mxu0 %v674
        %v1490 = vpop.f32.mrf.mxu0
        %v1491 = vadd.f32 0.0, %v1490
        %1492 = vmatmul.f32.gmra.mxu0 %v677
        %v1493 = vpop.f32.mrf.mxu0
        %v1494 = vadd.f32 0.0, %v1493
        %1495 = vdwg.mxu0
        %1496 = vmatpush.msra.mxu0 0.0
        %1497 = vmatpush.msra.mxu0 0.0
        %1498 = vmatpush.msra.mxu0 0.0
        %1499 = vmatpush.msra.mxu0 0.0
        %1500 = vmatpush.msra.mxu0 0.0
        %1501 = vmatpush.msra.mxu0 0.0
        %1502 = vmatpush.msra.mxu0 0.0
        %1503 = vmatpush.msra.mxu0 0.0
        %1504 = vmatpush.msra.mxu0 0.0
        %1505 = vmatpush.msra.mxu0 0.0
        %1506 = vmatpush.msra.mxu0 0.0
        %1507 = vmatpush.msra.mxu0 0.0
        %1508 = vmatpush.msra.mxu0 0.0
        %1509 = vmatpush.msra.mxu0 0.0
        %1510 = vmatpush.msra.mxu0 %v1472
        %1511 = vmatpush.msra.mxu0 %v1470
        %1512 = vmatmul.f32.gmra.mxu0 %v674
        %v1513 = vpop.f32.mrf.mxu0
        %v1514 = vadd.f32 0.0, %v1513
        %1515 = vmatmul.f32.gmra.mxu0 %v677
        %v1516 = vpop.f32.mrf.mxu0
        %v1517 = vadd.f32 0.0, %v1516
        %1518 = vdwg.mxu0
        %v1519 = vadd.f32 %v1491, %v1514
        %1520 = vadd.xlane.f32.xlu0 %v1519
        %v1521 = vpop.xlane.xlu0 %1520
        %v1522 = vadd.f32 %v1494, %v1517
        %1523 = vadd.xlane.f32.xlu0 %v1522
        %v1524 = vpop.xlane.xlu0 %1523
        %v1525 = vmul.f32 %v1521, 0.00390625
        %v1526 = vmul.f32 %v1524, 0.00390625
        %v1527 = vadd.f32 %v1525, 1e-05
        %v1528 = vadd.f32 %v1526, 1e-05
        %v1529 = vrsqrt.pop %v1527
        %v1530 = vmul.f32 %v1529, %v1527
        %v1531 = vmul.f32 %v1530, %v1529
        %v1532 = vmul.f32 0.5, %v1531
        %v1533 = vsub.f32 1.5, %v1532
        %v1534 = vmul.f32 %v1529, %v1533
        %vm1535 = vweird.f32 %v1527
        %vm1536 = vweird.f32 %v1529
        %vm1537 = vmor %vm1535, %vm1536
        %v1538 = vsel %vm1537, %v1529, %v1534
        %v1539 = vrsqrt.pop %v1528
        %v1540 = vmul.f32 %v1539, %v1528
        %v1541 = vmul.f32 %v1540, %v1539
        %v1542 = vmul.f32 0.5, %v1541
        %v1543 = vsub.f32 1.5, %v1542
        %v1544 = vmul.f32 %v1539, %v1543
        %vm1545 = vweird.f32 %v1528
        %vm1546 = vweird.f32 %v1539
        %vm1547 = vmor %vm1545, %vm1546
        %v1548 = vsel %vm1547, %v1539, %v1544
        %v1549 = vmul.f32 %v1465, %v1538
        %v1550 = vmul.f32 %v1466, %v1538
        %v1551 = vmul.f32 %v1467, %v1548
        %v1552 = vmul.f32 %v1468, %v1548
        %1553 = vset.pattern.permute.xlu0 4
        %1554 = vperm.xlu0 %1553, %v338
        %v1555 = vpop.permute.xlu0 %1554
        %1557 = vset.pattern.permute.xlu0 4
        %1558 = vperm.xlu0 %1557, %v339
        %v1559 = vpop.permute.xlu0 %1558
        %v1561 = vmul.f32 %v1549, %v1555
        %v1562 = vmul.f32 %v1550, %v1555
        %v1563 = vmul.f32 %v1551, %v1559
        %v1564 = vmul.f32 %v1552, %v1559
        %1565 = vset.pattern.permute.xlu0 5
        %1566 = vperm.xlu0 %1565, %v338
        %v1567 = vpop.permute.xlu0 %1566
        %1569 = vset.pattern.permute.xlu0 5
        %1570 = vperm.xlu0 %1569, %v339
        %v1571 = vpop.permute.xlu0 %1570
        %v1573 = vadd.f32 %v1561, %v1567
        %v1574 = vadd.f32 %v1562, %v1567
        %v1575 = vadd.f32 %v1563, %v1571
        %v1576 = vadd.f32 %v1564, %v1571
        %v1577 = vxor.u32 %v1573, 2147483648
        %v1578 = vxor.u32 %v1574, 2147483648
        %v1579 = vxor.u32 %v1575, 2147483648
        %v1580 = vxor.u32 %v1576, 2147483648
        %v1581 = vmul.f32 %v1577, 1.442695
        %v1582 = vpow.pop %v1581
        %v1583 = vmul.f32 %v1578, 1.442695
        %v1584 = vpow.pop %v1583
        %v1585 = vmul.f32 %v1579, 1.442695
        %v1586 = vpow.pop %v1585
        %v1587 = vmul.f32 %v1580, 1.442695
        %v1588 = vpow.pop %v1587
        %v1589 = vadd.f32 %v1582, 1.0
        %v1590 = vadd.f32 %v1584, 1.0
        %v1591 = vadd.f32 %v1586, 1.0
        %v1592 = vadd.f32 %v1588, 1.0
        %v1593 = vrcp.pop %v1589
        %v1594 = vmul.f32 %v1589, %v1593
        %v1595 = vsub.f32 1.0, %v1594
        %v1596 = vmul.f32 %v1593, %v1595
        %v1597 = vadd.f32 %v1593, %v1596
        %vm1598 = vweird.f32 %v1589
        %vm1599 = vweird.f32 %v1593
        %vm1600 = vmor %vm1598, %vm1599
        %v1601 = vsel %vm1600, %v1593, %v1597
        %v1602 = vand.u32 2147483647, %v1589
        %vm1603 = vcmp.eq.f32.partialorder %v1602, 8.507059e+37
        %v1604 = vand.u32 %v1589, 2147483648
        %v1605 = vor.u32 1.1754944e-38, %v1604
        %v1606 = vsel %vm1603, %v1605, %v1601
        %v1607 = vmul.f32 1.0, %v1606
        %v1608 = vrcp.pop %v1590
        %v1609 = vmul.f32 %v1590, %v1608
        %v1610 = vsub.f32 1.0, %v1609
        %v1611 = vmul.f32 %v1608, %v1610
        %v1612 = vadd.f32 %v1608, %v1611
        %vm1613 = vweird.f32 %v1590
        %vm1614 = vweird.f32 %v1608
        %vm1615 = vmor %vm1613, %vm1614
        %v1616 = vsel %vm1615, %v1608, %v1612
        %v1617 = vand.u32 2147483647, %v1590
        %vm1618 = vcmp.eq.f32.partialorder %v1617, 8.507059e+37
        %v1619 = vand.u32 %v1590, 2147483648
        %v1620 = vor.u32 1.1754944e-38, %v1619
        %v1621 = vsel %vm1618, %v1620, %v1616
        %v1622 = vmul.f32 1.0, %v1621
        %v1623 = vrcp.pop %v1591
        %v1624 = vmul.f32 %v1591, %v1623
        %v1625 = vsub.f32 1.0, %v1624
        %v1626 = vmul.f32 %v1623, %v1625
        %v1627 = vadd.f32 %v1623, %v1626
        %vm1628 = vweird.f32 %v1591
        %vm1629 = vweird.f32 %v1623
        %vm1630 = vmor %vm1628, %vm1629
        %v1631 = vsel %vm1630, %v1623, %v1627
        %v1632 = vand.u32 2147483647, %v1591
        %vm1633 = vcmp.eq.f32.partialorder %v1632, 8.507059e+37
        %v1634 = vand.u32 %v1591, 2147483648
        %v1635 = vor.u32 1.1754944e-38, %v1634
        %v1636 = vsel %vm1633, %v1635, %v1631
        %v1637 = vmul.f32 1.0, %v1636
        %v1638 = vrcp.pop %v1592
        %v1639 = vmul.f32 %v1592, %v1638
        %v1640 = vsub.f32 1.0, %v1639
        %v1641 = vmul.f32 %v1638, %v1640
        %v1642 = vadd.f32 %v1638, %v1641
        %vm1643 = vweird.f32 %v1592
        %vm1644 = vweird.f32 %v1638
        %vm1645 = vmor %vm1643, %vm1644
        %v1646 = vsel %vm1645, %v1638, %v1642
        %v1647 = vand.u32 2147483647, %v1592
        %vm1648 = vcmp.eq.f32.partialorder %v1647, 8.507059e+37
        %v1649 = vand.u32 %v1592, 2147483648
        %v1650 = vor.u32 1.1754944e-38, %v1649
        %v1651 = vsel %vm1648, %v1650, %v1646
        %v1652 = vmul.f32 1.0, %v1651
        %v1653 = vmul.f32 %v1573, %v1607
        %v1654 = vmul.f32 %v1574, %v1622
        %v1655 = vmul.f32 %v1575, %v1637
        %v1656 = vmul.f32 %v1576, %v1652
        %1657 = vst [vmem:[%s275] sm:$0xff] %v1653
        %1658 = vst [vmem:[%s275 + $0x8] sm:$0xff] %v1654
        %1659 = vst [vmem:[%s275 + $0x10] sm:$0xff] %v1655
        %1660 = vst [vmem:[%s275 + $0x18] sm:$0xff] %v1656
        %1661 = vst [vmem:[#allocation3 + $0x8] sm:$0xff] %v1653
        %1662 = vst [vmem:[#allocation3 + $0x10] sm:$0xff] %v1654
        %1663 = vst [vmem:[#allocation3 + $0x28] sm:$0xff] %v1655
        %1664 = vst [vmem:[#allocation3 + $0x30] sm:$0xff] %v1656
        %v1665 = vld [vmem:[#allocation3 + $0x8] sm:$0xff]
        %v1666 = vld [vmem:[#allocation3 + $0x10] sm:$0xff]
        %v1667 = vld [vmem:[#allocation3 + $0x18] sm:$0xff]
        %v1668 = vld [vmem:[#allocation3 + $0x28] sm:$0xff]
        %v1669 = vld [vmem:[#allocation3 + $0x30] sm:$0xff]
        %v1670 = vld [vmem:[#allocation3 + $0x38] sm:$0xff]
        %1677 = vrot.lane.b32.xlu0 %v1665, 127
        %v1678 = vpop.permute.xlu0 %1677
        %1679 = vrot.lane.b32.xlu0 %v1666, 127
        %v1680 = vpop.permute.xlu0 %1679
        %1681 = vrot.lane.b32.xlu0 %v1667, 127
        %v1682 = vpop.permute.xlu0 %1681
        %1683 = vrot.lane.b32.xlu0 %v1668, 127
        %v1684 = vpop.permute.xlu0 %1683
        %1685 = vrot.lane.b32.xlu0 %v1669, 127
        %v1686 = vpop.permute.xlu0 %1685
        %1687 = vrot.lane.b32.xlu0 %v1670, 127
        %v1688 = vpop.permute.xlu0 %1687
        %v1689 = vsel %vm379, %v1678, %v1680
        %v1690 = vsel %vm379, %v1680, %v1682
        %v1691 = vsel %vm379, %v1684, %v1686
        %v1692 = vsel %vm379, %v1686, %v1688
        %v1697 = vmax.f32 %v1653, %v1689
        %v1698 = vmax.f32 %v1654, %v1690
        %v1699 = vmax.f32 %v1655, %v1691
        %v1700 = vmax.f32 %v1656, %v1692
        %v1703 = vmax.f32 %v1665, %v1689
        %v1704 = vmax.f32 %v1666, %v1690
        %v1705 = vmax.f32 %v1667, %v1682
        %v1706 = vmax.f32 %v1668, %v1691
        %v1707 = vmax.f32 %v1669, %v1692
        %v1708 = vmax.f32 %v1670, %v1688
        %1715 = vrot.lane.b32.xlu0 %v1703, 112
        %v1716 = vpop.permute.xlu0 %1715
        %1717 = vrot.lane.b32.xlu0 %v1704, 112
        %v1718 = vpop.permute.xlu0 %1717
        %1719 = vrot.lane.b32.xlu0 %v1705, 112
        %v1720 = vpop.permute.xlu0 %1719
        %1721 = vrot.lane.b32.xlu0 %v1706, 112
        %v1722 = vpop.permute.xlu0 %1721
        %1723 = vrot.lane.b32.xlu0 %v1707, 112
        %v1724 = vpop.permute.xlu0 %1723
        %1725 = vrot.lane.b32.xlu0 %v1708, 112
        %v1726 = vpop.permute.xlu0 %1725
        %v1727 = vsel %vm463, %v1716, %v1718
        %v1728 = vsel %vm463, %v1718, %v1720
        %v1729 = vsel %vm463, %v1722, %v1724
        %v1730 = vsel %vm463, %v1724, %v1726
        %v1735 = vmax.f32 %v1697, %v1727
        %v1736 = vmax.f32 %v1698, %v1728
        %v1737 = vmax.f32 %v1699, %v1729
        %v1738 = vmax.f32 %v1700, %v1730
        %v1739 = vld [vmem:[%s5] sm:$0xff]
        %v1740 = vld [vmem:[%s5 + $0x8] sm:$0xff]
        %v1741 = vld [vmem:[%s5 + $0x10] sm:$0xff]
        %v1742 = vld [vmem:[%s5 + $0x18] sm:$0xff]
        %v1743 = vld [vmem:[%s5 + $0x20] sm:$0xff]
        %v1744 = vld [vmem:[%s5 + $0x28] sm:$0xff]
        %v1745 = vld [vmem:[%s5 + $0x30] sm:$0xff]
        %v1746 = vld [vmem:[%s5 + $0x38] sm:$0xff]
        %v1747 = vld [vmem:[%s5 + $0x40] sm:$0xff]
        %v1748 = vld [vmem:[%s5 + $0x48] sm:$0xff]
        %v1749 = vld [vmem:[%s5 + $0x50] sm:$0xff]
        %v1750 = vld [vmem:[%s5 + $0x58] sm:$0xff]
        %v1751 = vld [vmem:[%s5 + $0x60] sm:$0xff]
        %v1752 = vld [vmem:[%s5 + $0x68] sm:$0xff]
        %v1753 = vld [vmem:[%s5 + $0x70] sm:$0xff]
        %v1754 = vld [vmem:[%s5 + $0x78] sm:$0xff]
        %v1755 = vld [vmem:[%s5 + $0x80] sm:$0xff]
        %v1756 = vld [vmem:[%s5 + $0x88] sm:$0xff]
        %v1757 = vld [vmem:[%s5 + $0x90] sm:$0xff]
        %v1758 = vld [vmem:[%s5 + $0x98] sm:$0xff]
        %v1759 = vld [vmem:[%s5 + $0xa0] sm:$0xff]
        %v1760 = vld [vmem:[%s5 + $0xa8] sm:$0xff]
        %v1761 = vld [vmem:[%s5 + $0xb0] sm:$0xff]
        %v1762 = vld [vmem:[%s5 + $0xb8] sm:$0xff]
        %v1763 = vld [vmem:[%s5 + $0xc0] sm:$0xff]
        %v1764 = vld [vmem:[%s5 + $0xc8] sm:$0xff]
        %v1765 = vld [vmem:[%s5 + $0xd0] sm:$0xff]
        %v1766 = vld [vmem:[%s5 + $0xd8] sm:$0xff]
        %v1767 = vld [vmem:[%s5 + $0xe0] sm:$0xff]
        %v1768 = vld [vmem:[%s5 + $0xe8] sm:$0xff]
        %v1769 = vld [vmem:[%s5 + $0xf0] sm:$0xff]
        %v1770 = vld [vmem:[%s5 + $0xf8] sm:$0xff]
        %1771 = vmatpush.msra.mxu0 %v1754
        %1772 = vmatpush.msra.mxu0 %v1753
        %1773 = vmatpush.msra.mxu0 %v1752
        %1774 = vmatpush.msra.mxu0 %v1751
        %1775 = vmatpush.msra.mxu0 %v1750
        %1776 = vmatpush.msra.mxu0 %v1749
        %1777 = vmatpush.msra.mxu0 %v1748
        %1778 = vmatpush.msra.mxu0 %v1747
        %1779 = vmatpush.msra.mxu0 %v1746
        %1780 = vmatpush.msra.mxu0 %v1745
        %1781 = vmatpush.msra.mxu0 %v1744
        %1782 = vmatpush.msra.mxu0 %v1743
        %1783 = vmatpush.msra.mxu0 %v1742
        %1784 = vmatpush.msra.mxu0 %v1741
        %1785 = vmatpush.msra.mxu0 %v1740
        %1786 = vmatpush.msra.mxu0 %v1739
        %1787 = vmatmul.f32.gmra.mxu0 %v1735
        %v1788 = vpop.f32.mrf.mxu0
        %v1789 = vadd.f32 0.0, %v1788
        %1790 = vmatmul.f32.gmra.mxu0 %v1737
        %v1791 = vpop.f32.mrf.mxu0
        %v1792 = vadd.f32 0.0, %v1791
        %1793 = vdwg.mxu0
        %1794 = vmatpush.msra.mxu0 %v1770
        %1795 = vmatpush.msra.mxu0 %v1769
        %1796 = vmatpush.msra.mxu0 %v1768
        %1797 = vmatpush.msra.mxu0 %v1767
        %1798 = vmatpush.msra.mxu0 %v1766
        %1799 = vmatpush.msra.mxu0 %v1765
        %1800 = vmatpush.msra.mxu0 %v1764
        %1801 = vmatpush.msra.mxu0 %v1763
        %1802 = vmatpush.msra.mxu0 %v1762
        %1803 = vmatpush.msra.mxu0 %v1761
        %1804 = vmatpush.msra.mxu0 %v1760
        %1805 = vmatpush.msra.mxu0 %v1759
        %1806 = vmatpush.msra.mxu0 %v1758
        %1807 = vmatpush.msra.mxu0 %v1757
        %1808 = vmatpush.msra.mxu0 %v1756
        %1809 = vmatpush.msra.mxu0 %v1755
        %1810 = vmatmul.f32.gmra.mxu0 %v1736
        %v1811 = vpop.f32.mrf.mxu0
        %v1812 = vadd.f32 %v1789, %v1811
        %1813 = vmatmul.f32.gmra.mxu0 %v1738
        %v1814 = vpop.f32.mrf.mxu0
        %v1815 = vadd.f32 %v1792, %v1814
        %1816 = vdwg.mxu0
        %vm1817 = vcmask 523264
        %1818 = vst.msk [vmem:[%s282] sm:$0xff] %vm1817, %v1812
        %1819 = vst.msk [vmem:[%s282 + $0x8] sm:$0xff] %vm1817, %v1815
        %s1820 = sand.u32 %s164, 1
        %s1821 = scalar_lea.sflag [#allocation5], %s1820
        %s1822 = sand.u32 %s164, 1
        %s1823 = smul.addr %s1822, 32
        %s1824 = scalar_lea.vmem [#allocation4], %s1823
        %s1825 = sand.u32 %s190, 1
        %s1826 = scalar_lea.sflag [#allocation7], %s1825
        %s1827 = sand.u32 %s190, 1
        %s1828 = smul.addr %s1827, 16
        %s1829 = scalar_lea.vmem [#allocation6], %s1828
        // Predicated region
        $region45: #{tpu_custom_call.1} parent=43 // pred_check
          %p1830 = pneg %p174
        $region46: #{tpu_custom_call.1} parent=43 // pred_check_branch
          %1832 = sbr.rel (%p1830) target = $region48
        $region47: #{tpu_custom_call.1} parent=43 // pred_region
          %1834 = vsyncadd %s1821, 0
          %s1835 = smul.addr %s25, 4
          %s1836 = smul.addr %s1835, 8
          %s1837 = scalar_lea.hbm %s6, %s1836
          %s1838 = sshll.u32 %s1824, 4
          %s1839 = int_to_ptr.vmem [resolvable:$true] %s1838
          %s1840 = sshll.u32 %s1837, 4
          %s1841 = int_to_ptr.hbm [resolvable:$true] %s1840
          %1846 = dma.vmem_to_hbm [thread:$0]  %s1839, 512, %s1841, %s1821, 256, 256, 16
        $region48: #{tpu_custom_call.1} parent=43 // pred_fallthru
          _
        // Predicated region
        $region49: #{tpu_custom_call.1} parent=43 // pred_check
          %p1847 = pneg %p200
        $region50: #{tpu_custom_call.1} parent=43 // pred_check_branch
          %1849 = sbr.rel (%p1847) target = $region52
        $region51: #{tpu_custom_call.1} parent=43 // pred_region
          %1851 = vsyncadd %s1826, 0
          %s1852 = smul.addr %s25, 2
          %s1853 = smul.addr %s1852, 8
          %s1854 = scalar_lea.hbm %s7, %s1853
          %s1855 = sshll.u32 %s1829, 4
          %s1856 = int_to_ptr.vmem [resolvable:$true] %s1855
          %s1857 = sshll.u32 %s1854, 4
          %s1858 = int_to_ptr.hbm [resolvable:$true] %s1857
          %1863 = dma.vmem_to_hbm [thread:$0]  %s1856, 256, %s1858, %s1826, 128, 128, 8
        $region52: #{tpu_custom_call.1} parent=43 // pred_fallthru
          _
      $region44: #{tpu_custom_call.1} parent=5 // pred_fallthru
        _
      %p1864 = scmp.le.s32.totalorder 2, %s20
      // Predicated region
      $region53: #{tpu_custom_call.1} parent=5 // pred_check
        %p1865 = pneg %p1864
      $region54: #{tpu_custom_call.1} parent=5 // pred_check_branch
        %1867 = sbr.rel (%p1865) target = $region56
      $region55: #{tpu_custom_call.1} parent=5 // pred_region
        %s1868 = ssub.s32 %s20, 2
        // Predicated region
        $region57: #{tpu_custom_call.1} parent=55 // pred_check
          %p1869 = pneg %p180
        $region58: #{tpu_custom_call.1} parent=55 // pred_check_branch
          %1871 = sbr.rel (%p1869) target = $region60
        $region59: #{tpu_custom_call.1} parent=55 // pred_region
          %s1872 = sand.u32 %s165, 1
          %s1873 = scalar_lea.sflag [#allocation5], %s1872
          %s1874 = sand.u32 %s165, 1
          %s1875 = smul.addr %s1874, 32
          %s1876 = scalar_lea.vmem [#allocation4], %s1875
          %1878 = dma.done %s1873, 512
        $region60: #{tpu_custom_call.1} parent=55 // pred_fallthru
          _
        // Predicated region
        $region61: #{tpu_custom_call.1} parent=55 // pred_check
          %p1879 = pneg %p206
        $region62: #{tpu_custom_call.1} parent=55 // pred_check_branch
          %1881 = sbr.rel (%p1879) target = $region64
        $region63: #{tpu_custom_call.1} parent=55 // pred_region
          %s1882 = sand.u32 %s191, 1
          %s1883 = scalar_lea.sflag [#allocation7], %s1882
          %s1884 = sand.u32 %s191, 1
          %s1885 = smul.addr %s1884, 16
          %s1886 = scalar_lea.vmem [#allocation6], %s1885
          %1888 = dma.done %s1883, 256
        $region64: #{tpu_custom_call.1} parent=55 // pred_fallthru
          _
      $region56: #{tpu_custom_call.1} parent=5 // pred_fallthru
        _
    $region6: #{tpu_custom_call.1} parent=1 // loop_footer
      %s24 = sadd.s32 1, %s20
    $region7: #{tpu_custom_call.1} parent=1 // loop_footer_branch
      %19 = sbr.rel target = $region3
    $region8: #{tpu_custom_call.1} parent=1 // loop_exit
      _
    %1889 = vsyncpa [#allocation5], 1
    %s1890 = scalar_lea.sflag [#allocation5], 1
    %1891 = vsyncpa %s1890, 1
    %1892 = vsyncpa [#allocation7], 1
    %s1893 = scalar_lea.sflag [#allocation7], 1
    %1894 = vsyncpa %s1893, 1

</llo_original>
